<compile_context>
chip_gen: v7x
topology: tpu7x:2x2x1
jax: 0.10.0
libtpu: 0.0.40
codegen_flags: <defaults>
</compile_context>

<pallas_src>
import jax
import jax.numpy as jnp
from jax import lax
from jax.experimental import pallas as pl
from jax.experimental.pallas import tpu as pltpu

BN_EPS = 1e-5
LRELU_SLOPE = 0.01
LANES = 128


# ----------------------------------------------------------------------------
# In-kernel helpers (traced inside the fused kernel body)
# ----------------------------------------------------------------------------
def _bn_lrelu(h, gamma, beta):
    """BatchNorm1d (training-mode batch stats, two-pass variance) + LeakyReLU."""
    inv_n = 1.0 / h.shape[0]
    mu = jnp.sum(h, axis=0, keepdims=True) * inv_n
    d = h - mu
    var = jnp.sum(d * d, axis=0, keepdims=True) * inv_n
    y = d * lax.rsqrt(var + BN_EPS) * gamma + beta
    return jnp.where(y >= 0.0, y, LRELU_SLOPE * y)


def _apply_generator(x, layer_refs, n_hidden):
    """LinearGenerator: [Linear(no bias) -> BatchNorm1d -> LeakyReLU]*n -> Linear."""
    for li in range(n_hidden):
        w = layer_refs[3 * li][...]
        gamma = layer_refs[3 * li + 1][...]
        beta = layer_refs[3 * li + 2][...]
        h = jnp.dot(x, w, preferred_element_type=jnp.float32)
        x = _bn_lrelu(h, gamma, beta)
    w_out = layer_refs[3 * n_hidden][...]
    b_out = layer_refs[3 * n_hidden + 1][...]
    return jnp.dot(x, w_out, preferred_element_type=jnp.float32) + b_out


def _apply_generator_pair(x1, x2, layer_refs, n_hidden):
    """Two independent generator calls sharing ONE MXU weight push per layer.

    BatchNorm statistics are computed per row-segment so per-call BN semantics
    (two separate forward() calls in the reference) are preserved exactly.
    """
    n1 = x1.shape[0]
    x = jnp.concatenate([x1, x2], axis=0)
    for li in range(n_hidden):
        w = layer_refs[3 * li][...]
        gamma = layer_refs[3 * li + 1][...]
        beta = layer_refs[3 * li + 2][...]
        h = jnp.dot(x, w, preferred_element_type=jnp.float32)
        x = jnp.concatenate([_bn_lrelu(h[:n1], gamma, beta),
                             _bn_lrelu(h[n1:], gamma, beta)], axis=0)
    w_out = layer_refs[3 * n_hidden][...]
    b_out = layer_refs[3 * n_hidden + 1][...]
    out = jnp.dot(x, w_out, preferred_element_type=jnp.float32) + b_out
    return out[:n1], out[n1:]


def _connectivity(logits):
    """C = sigmoid(logits) * (1 - I); mask built in-kernel from iota."""
    S = logits.shape[0]
    ri = lax.broadcasted_iota(jnp.int32, (S, S), 0)
    ci = lax.broadcasted_iota(jnp.int32, (S, S), 1)
    eye_f = (ri == ci).astype(jnp.float32)
    C = jax.nn.sigmoid(logits) * (1.0 - eye_f)
    return C, eye_f


def _loss_transitivity(C):
    C2 = jnp.dot(C, C, preferred_element_type=jnp.float32)
    return jnp.sum(C2 * (1.0 - C), keepdims=True)                       # (1,1)


def _loss_nct(zp, zs):
    """mean_m min_k mean_d (Z_pred[m,d] - Z_samples[k,d])^2 via MXU Gram trick."""
    _, D = zp.shape
    dims = (((1,), (1,)), ((), ()))
    cross = lax.dot_general(zp, zs, dims, preferred_element_type=jnp.float32)    # (M,K)
    sq_p = jnp.sum(zp * zp, axis=1, keepdims=True)                               # (M,1)
    sq_s = lax.dot_general(jnp.ones((1, D), jnp.float32), zs * zs, dims,
                           preferred_element_type=jnp.float32)                   # (1,K)
    l2 = (sq_p + sq_s - 2.0 * cross) * (1.0 / D)
    return jnp.mean(jnp.min(l2, axis=1, keepdims=True), keepdims=True)           # (1,1)


def _loss_indep(x, C, eye_f):
    """sum_{i!=j, k not in {i,j}} xnor((C[i,j]+C[j,i])*C[j,k], pcorr2(i,k|j)) * corr2(i,k)."""
    B, S = x.shape
    mu = jnp.sum(x, axis=0, keepdims=True) * (1.0 / B)
    dx = x - mu
    G = lax.dot_general(dx, dx, (((0,), (0,)), ((), ())),
                        preferred_element_type=jnp.float32)             # (S,S) symmetric

    diag_row = jnp.sum(G * eye_f, axis=0, keepdims=True)                # (1,S): G[k,k]
    diag_col = jnp.sum(G * eye_f, axis=1, keepdims=True)                # (S,1): G[i,i]
    inv_diag_row = 1.0 / diag_row                                       # hoisted out of j-loop
    sc = (G * G) / (diag_col * diag_row)                                # corr^2(X_i, X_k)

    # C^T on the MXU (identity contraction) -> no XLU relayout / extra input.
    CT = lax.dot_general(eye_f, C, (((1,), (1,)), ((), ())),
                         preferred_element_type=jnp.float32)
    Csym = C + CT                                                       # C[i,j] + C[j,i]

    ri = lax.broadcasted_iota(jnp.int32, (S, S), 0)
    ci = lax.broadcasted_iota(jnp.int32, (S, S), 1)
    offdiag = ri != ci

    acc = jnp.zeros((S, S), jnp.float32)
    for j in range(S):                                   # S is small & static (unrolled)
        gj_row = G[j:j + 1, :]                           # (1,S): G[j,k]
        gj_col = G[:, j:j + 1]                           # (S,1): G[i,j]
        inv_gjj = inv_diag_row[:, j:j + 1]               # hoisted reciprocal 1/G[j,j]
        num = G - (gj_col * inv_gjj) * gj_row            # partial-covariance numerator
        mask = offdiag & (ri != j) & (ci != j)
        den_i = diag_col - gj_col * gj_col * inv_gjj     # 0 at i==j -> masked below
        den_k = diag_row - gj_row * gj_row * inv_gjj     # 0 at k==j -> masked below
        den = jnp.where(mask, den_i * den_k, 1.0)        # keep forward NaN/inf-free
        scc = (num * num) / den
        cval = Csym[:, j:j + 1] * C[j:j + 1, :]          # (C[i,j]+C[j,i]) * C[j,k]
        # TODO(synk): `xnor` is undefined in the reference source; using the
        #             soft XNOR a*b + (1-a)*(1-b).
        xnor_v = cval * scc + (1.0 - cval) * (1.0 - scc)
        acc = acc + jnp.where(mask, xnor_v * sc, 0.0)
    return jnp.sum(acc, keepdims=True)                   # single reduce at the end


# ----------------------------------------------------------------------------
# Fused kernel builder
# ----------------------------------------------------------------------------
def _make_fused_kernel(n_glo_hidden, n_trans_hidden, num_programs):
    n_glo_refs = 3 * n_glo_hidden + 2
    n_trans_refs = 3 * n_trans_hidden + 2

    def kernel(*refs):
        conn_ref, z_ref, zsamp_ref, x_ref, e1_ref, e2_ref = refs[0:6]
        p = 6
        glo_refs = refs[p:p + n_glo_refs]
        p += n_glo_refs
        trans_refs = refs[p:p + n_trans_refs]
        p += n_trans_refs
        out_ref = refs[p]

        lane = lax.broadcasted_iota(jnp.int32, (1, LANES), 1)

        def write_slab(pairs):
            slab = jnp.zeros((1, LANES), jnp.float32)
            for idx, v in pairs:                          # v is (1,1)
                slab = slab + v * (lane == idx).astype(jnp.float32)
            out_ref[...] = slab                           # one unmasked lane-dense store

        def mse(x_pred):
            diff = x_pred - x_ref[...]
            return jnp.sum(diff * diff, keepdims=True) * (1.0 / diff.size)

        if num_programs == 1:
            # ---- single-TC (v5e/v6e) path: one program, everything fused ----
            C, eye_f = _connectivity(conn_ref[...])       # computed once, shared
            l_trans = _loss_transitivity(C)
            # translator on e1 (NCT) and e2 (codes): one weight push per layer
            z_pred, codes = _apply_generator_pair(e1_ref[...], e2_ref[...],
                                                  trans_refs, n_trans_hidden)
            # GLO on z_logits (reconstruction) and codes (independence): shared too
            x_pred, x_pred2 = _apply_generator_pair(z_ref[...], codes,
                                                    glo_refs, n_glo_hidden)
            l_constr = mse(x_pred)
            l_trl = _loss_nct(z_pred, zsamp_ref[...])
            l_ind = _loss_indep(x_pred2, C, eye_f)
            write_slab([(0, l_trans), (1, l_constr), (2, l_trl), (3, l_ind)])
        else:
            # ---- 2-TC (v7x) path: balanced 2-way split, ~2 generator passes/core
            pid = pl.program_id(0)

            @pl.when(pid == 0)
            def _():
                C, _ = _connectivity(conn_ref[...])
                l_trans = _loss_transitivity(C)
                x_pred = _apply_generator(z_ref[...], glo_refs, n_glo_hidden)
                l_constr = mse(x_pred)
                z_pred = _apply_generator(e1_ref[...], trans_refs, n_trans_hidden)
                l_trl = _loss_nct(z_pred, zsamp_ref[...])
                write_slab([(0, l_trans), (1, l_constr), (2, l_trl)])

            @pl.when(pid == 1)
            def _():
                codes = _apply_generator(e2_ref[...], trans_refs, n_trans_hidden)
                x_pred2 = _apply_generator(codes, glo_refs, n_glo_hidden)
                C, eye_f = _connectivity(conn_ref[...])
                l_ind = _loss_indep(x_pred2, C, eye_f)
                write_slab([(3, l_ind)])

    return kernel


# ----------------------------------------------------------------------------
# Parameter init (deterministic, PyTorch-like shapes)
# ----------------------------------------------------------------------------
def init_linear(key, fan_in, fan_out, bias=True):
    kw, kb = jax.random.split(key)
    bound = 1.0 / float(fan_in) ** 0.5
    w = jax.random.uniform(kw, (fan_in, fan_out), jnp.float32, -bound, bound)
    if bias:
        b = jax.random.uniform(kb, (1, fan_out), jnp.float32, -bound, bound)
    else:
        b = jnp.zeros((1, fan_out), jnp.float32)
    return w, b


def init_generator(key, in_dim, hidden_dims, out_dim):
    keys = jax.random.split(key, len(hidden_dims) + 1)
    hidden = []
    prev = in_dim
    for k, h in zip(keys[:-1], hidden_dims):
        w, _ = init_linear(k, prev, h, bias=False)
        hidden.append((w, jnp.ones((1, h), jnp.float32), jnp.zeros((1, h), jnp.float32)))
        prev = h
    w, b = init_linear(keys[-1], prev, out_dim, bias=True)
    return {"hidden": hidden, "out": (w, b)}


# ----------------------------------------------------------------------------
# Device / cost helpers (host side)
# ----------------------------------------------------------------------------
def _two_tensorcores():
    """Only v7x has 2 TensorCores per chip; v5e/v6e (and CPU interpret) -> 1."""
    try:
        dev = jax.devices()[0]
        if dev.platform != "tpu":
            return False
        kind = (getattr(dev, "device_kind", "") or "").lower()
        return "v7" in kind
    except Exception:
        return False


def _generator_flops(rows, in_dim, hidden_dims, out_dim):
    f, prev = 0, in_dim
    for h in hidden_dims:
        f += 2 * rows * prev * h + 10 * rows * h
        prev = h
    return f + 2 * rows * prev * out_dim


# ----------------------------------------------------------------------------
# CausalityChainModel.forward (single fused pallas_call)
# ----------------------------------------------------------------------------
def causality_chain_forward(params, X, rng, N_samples=None,
                            reconst_weight=1.0, transitivity_weight=1.0,
                            independence_weight=1.0):
    conn = params["conn_logits"]
    Z = params["z_logits"]
    batch_size = int(params["batch_size"])
    noise_dim = int(params["noise_dim"])
    n2 = int(N_samples) if N_samples else batch_size

    glo_hidden = params["glo_gen"]["hidden"]
    glo_flat = [t for layer in glo_hidden for t in layer] + list(params["glo_gen"]["out"])
    trans_hidden = params["trans_gen"]["hidden"]
    trans_flat = [t for layer in trans_hidden for t in layer] + list(params["trans_gen"]["out"])

    k_perm, k_e1, k_e2 = jax.random.split(rng, 3)
    # torch.rand equivalents drawn on the host (tiny; TPU hw PRNG has no
    # CPU/interpret lowering).
    e1 = jax.random.uniform(k_e1, (batch_size, noise_dim), jnp.float32)
    e2 = jax.random.uniform(k_e2, (n2, noise_dim), jnp.float32)

    # loss_nct sample pool: when sample_batch_size >= n_samples the torch
    # permutation is a no-op for the min, so reuse z_logits directly (no gather).
    sample_bs = batch_size * 10
    if sample_bs >= Z.shape[0]:
        z_samples = Z
    else:
        z_samples = Z[jax.random.permutation(k_perm, Z.shape[0])[:sample_bs]]

    inputs = [conn, Z, z_samples, X, e1, e2] + glo_flat + trans_flat

    num_programs = 2 if _two_tensorcores() else 1
    kernel = _make_fused_kernel(len(glo_hidden), len(trans_hidden), num_programs)

    def _full_block(a):
        zeros = (0,) * a.ndim
        return pl.BlockSpec(a.shape, lambda *_args, _z=zeros: _z)

    size = int(conn.shape[0])
    latent = int(Z.shape[1])
    glo_dims = [int(w.shape[1]) for (w, _, _) in glo_hidden]
    trans_dims = [int(w.shape[1]) for (w, _, _) in trans_hidden]
    flops = (_generator_flops(int(Z.shape[0]) + n2, latent, glo_dims, size)
             + _generator_flops(batch_size + n2, noise_dim, trans_dims, latent)
             + 2 * batch_size * latent * int(z_samples.shape[0])   # NCT Gram
             + 2 * size ** 3                                       # transitivity
             + 2 * n2 * size * size                                # indep Gram
             + 20 * size ** 3)                                     # indep j-loop
    transcendentals = size * size + 2 * (sum(glo_dims) + sum(trans_dims))
    bytes_accessed = int(sum(int(a.size) * a.dtype.itemsize for a in inputs)
                         + num_programs * LANES * 4)

    if num_programs == 2:
        dim_sem = (pltpu.CORE_PARALLEL,)   # actually shard the 2 steps on v7x's 2 TCs
    else:
        dim_sem = ("arbitrary",)

    slab = pl.pallas_call(
        kernel,
        out_shape=jax.ShapeDtypeStruct((num_programs, LANES), jnp.float32),
        grid=(num_programs,),
        in_specs=[_full_block(a) for a in inputs],
        out_specs=pl.BlockSpec((1, LANES), lambda i: (i, 0)),
        compiler_params=pltpu.CompilerParams(dimension_semantics=dim_sem),
        cost_estimate=pl.CostEstimate(flops=int(flops),
                                      transcendentals=int(transcendentals),
                                      bytes_accessed=bytes_accessed),
    )(*inputs)

    vals = jnp.sum(slab, axis=0)          # rows hold disjoint lanes -> sum is a merge
    loss_trans = vals[0]
    loss_constr = vals[1]
    loss_trl = vals[2]
    loss_ind = vals[3]
    loss = (loss_trans * transitivity_weight
            + (loss_constr + loss_trl) * reconst_weight
            + loss_ind * independence_weight)
    terms = {"loss_trans": loss_trans,
             "loss_translator": loss_trl,
             "loss_construction": loss_constr,
             "loss_independence": loss_ind}
    return loss, terms


# ----------------------------------------------------------------------------
if __name__ == "__main__":
    SIZE = 8          # number of observed variables (output dim of GLO generator)
    N_SAMPLES = 64    # GLO dataset size
    LATENT = 16       # latent_embed_dim
    NOISE = 8         # translator noise_dim
    BATCH = 8         # translator batch_size
    HIDDEN = [32]     # hidden dims of both LinearGenerators

    root = jax.random.PRNGKey(0)
    k_z, k_glo, k_trans, k_x, k_fwd = jax.random.split(root, 5)

    params = {
        "conn_logits": jnp.zeros((SIZE, SIZE), jnp.float32),      # as in __init__
        "z_logits": jax.random.normal(k_z, (N_SAMPLES, LATENT), jnp.float32),
        "glo_gen": init_generator(k_glo, LATENT, HIDDEN, SIZE),   # output_dim forced to size
        "trans_gen": init_generator(k_trans, NOISE, HIDDEN, LATENT),
        "batch_size": BATCH,
        "noise_dim": NOISE,
    }
    X = jax.random.normal(k_x, (N_SAMPLES, SIZE), jnp.float32)

    loss, terms = causality_chain_forward(params, X, k_fwd)
    loss = jax.block_until_ready(loss)
    assert bool(jnp.isfinite(loss)), "loss is not finite"
    print("KERNEL_OK")
</pallas_src>

<mosaic_0001>
module attributes {stable_mosaic.version = 11 : i64} {
  func.func @kernel(%arg0: i32, %arg1: memref<8x8xf32, #tpu.memory_space<vmem>>, %arg2: memref<64x16xf32, #tpu.memory_space<vmem>>, %arg3: memref<64x16xf32, #tpu.memory_space<vmem>>, %arg4: memref<64x8xf32, #tpu.memory_space<vmem>>, %arg5: memref<8x8xf32, #tpu.memory_space<vmem>>, %arg6: memref<8x8xf32, #tpu.memory_space<vmem>>, %arg7: memref<16x32xf32, #tpu.memory_space<vmem>>, %arg8: memref<1x32xf32, #tpu.memory_space<vmem>>, %arg9: memref<1x32xf32, #tpu.memory_space<vmem>>, %arg10: memref<32x8xf32, #tpu.memory_space<vmem>>, %arg11: memref<1x8xf32, #tpu.memory_space<vmem>>, %arg12: memref<8x32xf32, #tpu.memory_space<vmem>>, %arg13: memref<1x32xf32, #tpu.memory_space<vmem>>, %arg14: memref<1x32xf32, #tpu.memory_space<vmem>>, %arg15: memref<32x16xf32, #tpu.memory_space<vmem>>, %arg16: memref<1x16xf32, #tpu.memory_space<vmem>>, %arg17: memref<1x128xf32, #tpu.memory_space<vmem>>) attributes {dimension_semantics = [#tpu.dimension_semantics<arbitrary>], iteration_bounds = array<i64: 1>, scalar_prefetch = 0 : i64, scratch_operands = 0 : i64, tpu.core_type = #tpu.core_type<tc>, window_params = [{pipeline_mode = #tpu.pipeline_mode<synchronous>, transform_indices = @transform_0, window_bounds = array<i64: 8, 8>}, {pipeline_mode = #tpu.pipeline_mode<synchronous>, transform_indices = @transform_1, window_bounds = array<i64: 64, 16>}, {pipeline_mode = #tpu.pipeline_mode<synchronous>, transform_indices = @transform_2, window_bounds = array<i64: 64, 16>}, {pipeline_mode = #tpu.pipeline_mode<synchronous>, transform_indices = @transform_3, window_bounds = array<i64: 64, 8>}, {pipeline_mode = #tpu.pipeline_mode<synchronous>, transform_indices = @transform_4, window_bounds = array<i64: 8, 8>}, {pipeline_mode = #tpu.pipeline_mode<synchronous>, transform_indices = @transform_5, window_bounds = array<i64: 8, 8>}, {pipeline_mode = #tpu.pipeline_mode<synchronous>, transform_indices = @transform_6, window_bounds = array<i64: 16, 32>}, {pipeline_mode = #tpu.pipeline_mode<synchronous>, transform_indices = @transform_7, window_bounds = array<i64: 1, 32>}, {pipeline_mode = #tpu.pipeline_mode<synchronous>, transform_indices = @transform_8, window_bounds = array<i64: 1, 32>}, {pipeline_mode = #tpu.pipeline_mode<synchronous>, transform_indices = @transform_9, window_bounds = array<i64: 32, 8>}, {pipeline_mode = #tpu.pipeline_mode<synchronous>, transform_indices = @transform_10, window_bounds = array<i64: 1, 8>}, {pipeline_mode = #tpu.pipeline_mode<synchronous>, transform_indices = @transform_11, window_bounds = array<i64: 8, 32>}, {pipeline_mode = #tpu.pipeline_mode<synchronous>, transform_indices = @transform_12, window_bounds = array<i64: 1, 32>}, {pipeline_mode = #tpu.pipeline_mode<synchronous>, transform_indices = @transform_13, window_bounds = array<i64: 1, 32>}, {pipeline_mode = #tpu.pipeline_mode<synchronous>, transform_indices = @transform_14, window_bounds = array<i64: 32, 16>}, {pipeline_mode = #tpu.pipeline_mode<synchronous>, transform_indices = @transform_15, window_bounds = array<i64: 1, 16>}, {transform_indices = @transform_16, window_bounds = array<i64: 1, 128>}]} {
    %0 = tpu.iota {dimensions = array<i32: 1>} : vector<1x128xi32>
    %c0 = arith.constant 0 : index
    %c0_0 = arith.constant 0 : index
    %1 = vector.load %arg1[%c0, %c0_0] : memref<8x8xf32, #tpu.memory_space<vmem>>, vector<8x8xf32>
    %2 = tpu.iota {dimensions = array<i32: 0>} : vector<8x8xi32>
    %3 = tpu.iota {dimensions = array<i32: 1>} : vector<8x8xi32>
    %4 = arith.cmpi eq, %2, %3 : vector<8x8xi32>
    %5 = arith.extui %4 : vector<8x8xi1> to vector<8x8xi32>
    %6 = arith.sitofp %5 : vector<8x8xi32> to vector<8x8xf32>
    %7 = arith.negf %1 : vector<8x8xf32>
    %8 = math.exp %7 : vector<8x8xf32>
    %cst = arith.constant 1.000000e+00 : f32
    %9 = vector.broadcast %cst : f32 to vector<8x8xf32>
    %10 = arith.addf %9, %8 : vector<8x8xf32>
    %11 = arith.divf %9, %10 : vector<8x8xf32>
    %cst_1 = arith.constant 1.000000e+00 : f32
    %12 = vector.broadcast %cst_1 : f32 to vector<8x8xf32>
    %13 = arith.subf %12, %6 : vector<8x8xf32>
    %14 = arith.mulf %11, %13 : vector<8x8xf32>
    %cst_2 = arith.constant dense<0.000000e+00> : vector<8x8xf32>
    %15 = tpu.matmul %14, %14, %cst_2 {dimension_numbers = #tpu.dot_dimension_numbers<[1], [0], [0], [1], [0, 0, 1, 1], [], []>} : vector<8x8xf32>, vector<8x8xf32>, vector<8x8xf32> -> vector<8x8xf32>
    %cst_3 = arith.constant 1.000000e+00 : f32
    %16 = vector.broadcast %cst_3 : f32 to vector<8x8xf32>
    %17 = arith.subf %16, %14 : vector<8x8xf32>
    %18 = arith.mulf %15, %17 : vector<8x8xf32>
    %19 = vector.shape_cast %18 : vector<8x8xf32> to vector<1x8x8xf32>
    %cst_4 = arith.constant dense<0.000000e+00> : vector<1xf32>
    %20 = vector.multi_reduction <add>, %19, %cst_4 [1, 2] : vector<1x8x8xf32> to vector<1xf32>
    %21 = vector.shape_cast %20 : vector<1xf32> to vector<1x1x1xf32>
    %22 = vector.extract %21[0, 0, 0] : f32 from vector<1x1x1xf32>
    %23 = vector.broadcast %22 : f32 to vector<1x1xf32>
    %c0_5 = arith.constant 0 : index
    %c0_6 = arith.constant 0 : index
    %24 = vector.load %arg5[%c0_5, %c0_6] : memref<8x8xf32, #tpu.memory_space<vmem>>, vector<8x8xf32>
    %c0_7 = arith.constant 0 : index
    %c0_8 = arith.constant 0 : index
    %25 = vector.load %arg6[%c0_7, %c0_8] : memref<8x8xf32, #tpu.memory_space<vmem>>, vector<8x8xf32>
    %26 = tpu.concatenate %24, %25 in 0 : vector<8x8xf32>, vector<8x8xf32> -> vector<16x8xf32>
    %c0_9 = arith.constant 0 : index
    %c0_10 = arith.constant 0 : index
    %27 = vector.load %arg12[%c0_9, %c0_10] : memref<8x32xf32, #tpu.memory_space<vmem>>, vector<8x32xf32>
    %c0_11 = arith.constant 0 : index
    %c0_12 = arith.constant 0 : index
    %28 = vector.load %arg13[%c0_11, %c0_12] : memref<1x32xf32, #tpu.memory_space<vmem>>, vector<1x32xf32>
    %c0_13 = arith.constant 0 : index
    %c0_14 = arith.constant 0 : index
    %29 = vector.load %arg14[%c0_13, %c0_14] : memref<1x32xf32, #tpu.memory_space<vmem>>, vector<1x32xf32>
    %cst_15 = arith.constant dense<0.000000e+00> : vector<16x32xf32>
    %30 = tpu.matmul %26, %27, %cst_15 {dimension_numbers = #tpu.dot_dimension_numbers<[1], [0], [0], [1], [0, 0, 1, 1], [], []>} : vector<16x8xf32>, vector<8x32xf32>, vector<16x32xf32> -> vector<16x32xf32>
    %31 = vector.extract_strided_slice %30 {offsets = [0, 0], sizes = [8, 32], strides = [1, 1]} : vector<16x32xf32> to vector<8x32xf32>
    %cst_16 = arith.constant dense<0.000000e+00> : vector<32xf32>
    %32 = vector.multi_reduction <add>, %31, %cst_16 [0] : vector<8x32xf32> to vector<32xf32>
    %33 = vector.shape_cast %32 : vector<32xf32> to vector<1x32xf32>
    %cst_17 = arith.constant 1.250000e-01 : f32
    %34 = vector.broadcast %cst_17 : f32 to vector<1x32xf32>
    %35 = arith.mulf %33, %34 : vector<1x32xf32>
    %36 = vector.broadcast %35 : vector<1x32xf32> to vector<8x32xf32>
    %37 = arith.subf %31, %36 : vector<8x32xf32>
    %38 = arith.mulf %37, %37 : vector<8x32xf32>
    %cst_18 = arith.constant dense<0.000000e+00> : vector<32xf32>
    %39 = vector.multi_reduction <add>, %38, %cst_18 [0] : vector<8x32xf32> to vector<32xf32>
    %40 = vector.shape_cast %39 : vector<32xf32> to vector<1x32xf32>
    %cst_19 = arith.constant 1.250000e-01 : f32
    %41 = vector.broadcast %cst_19 : f32 to vector<1x32xf32>
    %42 = arith.mulf %40, %41 : vector<1x32xf32>
    %cst_20 = arith.constant 9.99999974E-6 : f32
    %43 = vector.broadcast %cst_20 : f32 to vector<1x32xf32>
    %44 = arith.addf %42, %43 : vector<1x32xf32>
    %45 = math.rsqrt %44 : vector<1x32xf32>
    %46 = vector.broadcast %45 : vector<1x32xf32> to vector<8x32xf32>
    %47 = arith.mulf %37, %46 : vector<8x32xf32>
    %48 = vector.broadcast %28 : vector<1x32xf32> to vector<8x32xf32>
    %49 = arith.mulf %47, %48 : vector<8x32xf32>
    %50 = vector.broadcast %29 : vector<1x32xf32> to vector<8x32xf32>
    %51 = arith.addf %49, %50 : vector<8x32xf32>
    %cst_21 = arith.constant 0.000000e+00 : f32
    %52 = vector.broadcast %cst_21 : f32 to vector<8x32xf32>
    %53 = arith.cmpf oge, %51, %52 : vector<8x32xf32>
    %cst_22 = arith.constant 0.00999999977 : f32
    %54 = vector.broadcast %cst_22 : f32 to vector<8x32xf32>
    %55 = arith.mulf %54, %51 : vector<8x32xf32>
    %56 = arith.select %53, %51, %55 : vector<8x32xi1>, vector<8x32xf32>
    %57 = vector.extract_strided_slice %30 {offsets = [8, 0], sizes = [8, 32], strides = [1, 1]} : vector<16x32xf32> to vector<8x32xf32>
    %cst_23 = arith.constant dense<0.000000e+00> : vector<32xf32>
    %58 = vector.multi_reduction <add>, %57, %cst_23 [0] : vector<8x32xf32> to vector<32xf32>
    %59 = vector.shape_cast %58 : vector<32xf32> to vector<1x32xf32>
    %cst_24 = arith.constant 1.250000e-01 : f32
    %60 = vector.broadcast %cst_24 : f32 to vector<1x32xf32>
    %61 = arith.mulf %59, %60 : vector<1x32xf32>
    %62 = vector.broadcast %61 : vector<1x32xf32> to vector<8x32xf32>
    %63 = arith.subf %57, %62 : vector<8x32xf32>
    %64 = arith.mulf %63, %63 : vector<8x32xf32>
    %cst_25 = arith.constant dense<0.000000e+00> : vector<32xf32>
    %65 = vector.multi_reduction <add>, %64, %cst_25 [0] : vector<8x32xf32> to vector<32xf32>
    %66 = vector.shape_cast %65 : vector<32xf32> to vector<1x32xf32>
    %cst_26 = arith.constant 1.250000e-01 : f32
    %67 = vector.broadcast %cst_26 : f32 to vector<1x32xf32>
    %68 = arith.mulf %66, %67 : vector<1x32xf32>
    %cst_27 = arith.constant 9.99999974E-6 : f32
    %69 = vector.broadcast %cst_27 : f32 to vector<1x32xf32>
    %70 = arith.addf %68, %69 : vector<1x32xf32>
    %71 = math.rsqrt %70 : vector<1x32xf32>
    %72 = vector.broadcast %71 : vector<1x32xf32> to vector<8x32xf32>
    %73 = arith.mulf %63, %72 : vector<8x32xf32>
    %74 = vector.broadcast %28 : vector<1x32xf32> to vector<8x32xf32>
    %75 = arith.mulf %73, %74 : vector<8x32xf32>
    %76 = vector.broadcast %29 : vector<1x32xf32> to vector<8x32xf32>
    %77 = arith.addf %75, %76 : vector<8x32xf32>
    %cst_28 = arith.constant 0.000000e+00 : f32
    %78 = vector.broadcast %cst_28 : f32 to vector<8x32xf32>
    %79 = arith.cmpf oge, %77, %78 : vector<8x32xf32>
    %cst_29 = arith.constant 0.00999999977 : f32
    %80 = vector.broadcast %cst_29 : f32 to vector<8x32xf32>
    %81 = arith.mulf %80, %77 : vector<8x32xf32>
    %82 = arith.select %79, %77, %81 : vector<8x32xi1>, vector<8x32xf32>
    %83 = tpu.concatenate %56, %82 in 0 : vector<8x32xf32>, vector<8x32xf32> -> vector<16x32xf32>
    %c0_30 = arith.constant 0 : index
    %c0_31 = arith.constant 0 : index
    %84 = vector.load %arg15[%c0_30, %c0_31] : memref<32x16xf32, #tpu.memory_space<vmem>>, vector<32x16xf32>
    %c0_32 = arith.constant 0 : index
    %c0_33 = arith.constant 0 : index
    %85 = vector.load %arg16[%c0_32, %c0_33] : memref<1x16xf32, #tpu.memory_space<vmem>>, vector<1x16xf32>
    %cst_34 = arith.constant dense<0.000000e+00> : vector<16x16xf32>
    %86 = tpu.matmul %83, %84, %cst_34 {dimension_numbers = #tpu.dot_dimension_numbers<[1], [0], [0], [1], [0, 0, 1, 1], [], []>} : vector<16x32xf32>, vector<32x16xf32>, vector<16x16xf32> -> vector<16x16xf32>
    %87 = vector.broadcast %85 : vector<1x16xf32> to vector<16x16xf32>
    %88 = arith.addf %86, %87 : vector<16x16xf32>
    %89 = vector.extract_strided_slice %88 {offsets = [0, 0], sizes = [8, 16], strides = [1, 1]} : vector<16x16xf32> to vector<8x16xf32>
    %90 = vector.extract_strided_slice %88 {offsets = [8, 0], sizes = [8, 16], strides = [1, 1]} : vector<16x16xf32> to vector<8x16xf32>
    %c0_35 = arith.constant 0 : index
    %c0_36 = arith.constant 0 : index
    %91 = vector.load %arg2[%c0_35, %c0_36] : memref<64x16xf32, #tpu.memory_space<vmem>>, vector<64x16xf32>
    %92 = tpu.concatenate %91, %90 in 0 : vector<64x16xf32>, vector<8x16xf32> -> vector<72x16xf32>
    %c0_37 = arith.constant 0 : index
    %c0_38 = arith.constant 0 : index
    %93 = vector.load %arg7[%c0_37, %c0_38] : memref<16x32xf32, #tpu.memory_space<vmem>>, vector<16x32xf32>
    %c0_39 = arith.constant 0 : index
    %c0_40 = arith.constant 0 : index
    %94 = vector.load %arg8[%c0_39, %c0_40] : memref<1x32xf32, #tpu.memory_space<vmem>>, vector<1x32xf32>
    %c0_41 = arith.constant 0 : index
    %c0_42 = arith.constant 0 : index
    %95 = vector.load %arg9[%c0_41, %c0_42] : memref<1x32xf32, #tpu.memory_space<vmem>>, vector<1x32xf32>
    %cst_43 = arith.constant dense<0.000000e+00> : vector<72x32xf32>
    %96 = tpu.matmul %92, %93, %cst_43 {dimension_numbers = #tpu.dot_dimension_numbers<[1], [0], [0], [1], [0, 0, 1, 1], [], []>} : vector<72x16xf32>, vector<16x32xf32>, vector<72x32xf32> -> vector<72x32xf32>
    %97 = vector.extract_strided_slice %96 {offsets = [0, 0], sizes = [64, 32], strides = [1, 1]} : vector<72x32xf32> to vector<64x32xf32>
    %cst_44 = arith.constant dense<0.000000e+00> : vector<32xf32>
    %98 = vector.multi_reduction <add>, %97, %cst_44 [0] : vector<64x32xf32> to vector<32xf32>
    %99 = vector.shape_cast %98 : vector<32xf32> to vector<1x32xf32>
    %cst_45 = arith.constant 1.562500e-02 : f32
    %100 = vector.broadcast %cst_45 : f32 to vector<1x32xf32>
    %101 = arith.mulf %99, %100 : vector<1x32xf32>
    %102 = vector.broadcast %101 : vector<1x32xf32> to vector<64x32xf32>
    %103 = arith.subf %97, %102 : vector<64x32xf32>
    %104 = arith.mulf %103, %103 : vector<64x32xf32>
    %cst_46 = arith.constant dense<0.000000e+00> : vector<32xf32>
    %105 = vector.multi_reduction <add>, %104, %cst_46 [0] : vector<64x32xf32> to vector<32xf32>
    %106 = vector.shape_cast %105 : vector<32xf32> to vector<1x32xf32>
    %cst_47 = arith.constant 1.562500e-02 : f32
    %107 = vector.broadcast %cst_47 : f32 to vector<1x32xf32>
    %108 = arith.mulf %106, %107 : vector<1x32xf32>
    %cst_48 = arith.constant 9.99999974E-6 : f32
    %109 = vector.broadcast %cst_48 : f32 to vector<1x32xf32>
    %110 = arith.addf %108, %109 : vector<1x32xf32>
    %111 = math.rsqrt %110 : vector<1x32xf32>
    %112 = vector.broadcast %111 : vector<1x32xf32> to vector<64x32xf32>
    %113 = arith.mulf %103, %112 : vector<64x32xf32>
    %114 = vector.broadcast %94 : vector<1x32xf32> to vector<64x32xf32>
    %115 = arith.mulf %113, %114 : vector<64x32xf32>
    %116 = vector.broadcast %95 : vector<1x32xf32> to vector<64x32xf32>
    %117 = arith.addf %115, %116 : vector<64x32xf32>
    %cst_49 = arith.constant 0.000000e+00 : f32
    %118 = vector.broadcast %cst_49 : f32 to vector<64x32xf32>
    %119 = arith.cmpf oge, %117, %118 : vector<64x32xf32>
    %cst_50 = arith.constant 0.00999999977 : f32
    %120 = vector.broadcast %cst_50 : f32 to vector<64x32xf32>
    %121 = arith.mulf %120, %117 : vector<64x32xf32>
    %122 = arith.select %119, %117, %121 : vector<64x32xi1>, vector<64x32xf32>
    %123 = vector.extract_strided_slice %96 {offsets = [64, 0], sizes = [8, 32], strides = [1, 1]} : vector<72x32xf32> to vector<8x32xf32>
    %cst_51 = arith.constant dense<0.000000e+00> : vector<32xf32>
    %124 = vector.multi_reduction <add>, %123, %cst_51 [0] : vector<8x32xf32> to vector<32xf32>
    %125 = vector.shape_cast %124 : vector<32xf32> to vector<1x32xf32>
    %cst_52 = arith.constant 1.250000e-01 : f32
    %126 = vector.broadcast %cst_52 : f32 to vector<1x32xf32>
    %127 = arith.mulf %125, %126 : vector<1x32xf32>
    %128 = vector.broadcast %127 : vector<1x32xf32> to vector<8x32xf32>
    %129 = arith.subf %123, %128 : vector<8x32xf32>
    %130 = arith.mulf %129, %129 : vector<8x32xf32>
    %cst_53 = arith.constant dense<0.000000e+00> : vector<32xf32>
    %131 = vector.multi_reduction <add>, %130, %cst_53 [0] : vector<8x32xf32> to vector<32xf32>
    %132 = vector.shape_cast %131 : vector<32xf32> to vector<1x32xf32>
    %cst_54 = arith.constant 1.250000e-01 : f32
    %133 = vector.broadcast %cst_54 : f32 to vector<1x32xf32>
    %134 = arith.mulf %132, %133 : vector<1x32xf32>
    %cst_55 = arith.constant 9.99999974E-6 : f32
    %135 = vector.broadcast %cst_55 : f32 to vector<1x32xf32>
    %136 = arith.addf %134, %135 : vector<1x32xf32>
    %137 = math.rsqrt %136 : vector<1x32xf32>
    %138 = vector.broadcast %137 : vector<1x32xf32> to vector<8x32xf32>
    %139 = arith.mulf %129, %138 : vector<8x32xf32>
    %140 = vector.broadcast %94 : vector<1x32xf32> to vector<8x32xf32>
    %141 = arith.mulf %139, %140 : vector<8x32xf32>
    %142 = vector.broadcast %95 : vector<1x32xf32> to vector<8x32xf32>
    %143 = arith.addf %141, %142 : vector<8x32xf32>
    %cst_56 = arith.constant 0.000000e+00 : f32
    %144 = vector.broadcast %cst_56 : f32 to vector<8x32xf32>
    %145 = arith.cmpf oge, %143, %144 : vector<8x32xf32>
    %cst_57 = arith.constant 0.00999999977 : f32
    %146 = vector.broadcast %cst_57 : f32 to vector<8x32xf32>
    %147 = arith.mulf %146, %143 : vector<8x32xf32>
    %148 = arith.select %145, %143, %147 : vector<8x32xi1>, vector<8x32xf32>
    %149 = tpu.concatenate %122, %148 in 0 : vector<64x32xf32>, vector<8x32xf32> -> vector<72x32xf32>
    %c0_58 = arith.constant 0 : index
    %c0_59 = arith.constant 0 : index
    %150 = vector.load %arg10[%c0_58, %c0_59] : memref<32x8xf32, #tpu.memory_space<vmem>>, vector<32x8xf32>
    %c0_60 = arith.constant 0 : index
    %c0_61 = arith.constant 0 : index
    %151 = vector.load %arg11[%c0_60, %c0_61] : memref<1x8xf32, #tpu.memory_space<vmem>>, vector<1x8xf32>
    %cst_62 = arith.constant dense<0.000000e+00> : vector<72x8xf32>
    %152 = tpu.matmul %149, %150, %cst_62 {dimension_numbers = #tpu.dot_dimension_numbers<[1], [0], [0], [1], [0, 0, 1, 1], [], []>} : vector<72x32xf32>, vector<32x8xf32>, vector<72x8xf32> -> vector<72x8xf32>
    %153 = vector.broadcast %151 : vector<1x8xf32> to vector<72x8xf32>
    %154 = arith.addf %152, %153 : vector<72x8xf32>
    %155 = vector.extract_strided_slice %154 {offsets = [0, 0], sizes = [64, 8], strides = [1, 1]} : vector<72x8xf32> to vector<64x8xf32>
    %156 = vector.extract_strided_slice %154 {offsets = [64, 0], sizes = [8, 8], strides = [1, 1]} : vector<72x8xf32> to vector<8x8xf32>
    %c0_63 = arith.constant 0 : index
    %c0_64 = arith.constant 0 : index
    %157 = vector.load %arg4[%c0_63, %c0_64] : memref<64x8xf32, #tpu.memory_space<vmem>>, vector<64x8xf32>
    %158 = arith.subf %155, %157 : vector<64x8xf32>
    %159 = arith.mulf %158, %158 : vector<64x8xf32>
    %160 = vector.shape_cast %159 : vector<64x8xf32> to vector<1x64x8xf32>
    %cst_65 = arith.constant dense<0.000000e+00> : vector<1xf32>
    %161 = vector.multi_reduction <add>, %160, %cst_65 [1, 2] : vector<1x64x8xf32> to vector<1xf32>
    %162 = vector.shape_cast %161 : vector<1xf32> to vector<1x1x1xf32>
    %163 = vector.extract %162[0, 0, 0] : f32 from vector<1x1x1xf32>
    %164 = vector.broadcast %163 : f32 to vector<1x1xf32>
    %cst_66 = arith.constant 0.001953125 : f32
    %165 = vector.broadcast %cst_66 : f32 to vector<1x1xf32>
    %166 = arith.mulf %164, %165 : vector<1x1xf32>
    %c0_67 = arith.constant 0 : index
    %c0_68 = arith.constant 0 : index
    %167 = vector.load %arg3[%c0_67, %c0_68] : memref<64x16xf32, #tpu.memory_space<vmem>>, vector<64x16xf32>
    %cst_69 = arith.constant dense<0.000000e+00> : vector<8x64xf32>
    %168 = tpu.matmul %89, %167, %cst_69 {dimension_numbers = #tpu.dot_dimension_numbers<[1], [1], [0], [0], [0, 0, 1, 0], [], []>} : vector<8x16xf32>, vector<64x16xf32>, vector<8x64xf32> -> vector<8x64xf32>
    %169 = arith.mulf %89, %89 : vector<8x16xf32>
    %cst_70 = arith.constant dense<0.000000e+00> : vector<8xf32>
    %170 = vector.multi_reduction <add>, %169, %cst_70 [1] : vector<8x16xf32> to vector<8xf32>
    %171 = vector.shape_cast %170 : vector<8xf32> to vector<8x1xf32>
    %cst_71 = arith.constant 1.000000e+00 : f32
    %172 = vector.broadcast %cst_71 : f32 to vector<1x16xf32>
    %173 = arith.mulf %167, %167 : vector<64x16xf32>
    %cst_72 = arith.constant dense<0.000000e+00> : vector<1x64xf32>
    %174 = tpu.matmul %172, %173, %cst_72 {dimension_numbers = #tpu.dot_dimension_numbers<[1], [1], [0], [0], [0, 0, 1, 0], [], []>} : vector<1x16xf32>, vector<64x16xf32>, vector<1x64xf32> -> vector<1x64xf32>
    %175 = vector.broadcast %171 : vector<8x1xf32> to vector<8x64xf32>
    %176 = vector.broadcast %174 : vector<1x64xf32> to vector<8x64xf32>
    %177 = arith.addf %175, %176 : vector<8x64xf32>
    %cst_73 = arith.constant 2.000000e+00 : f32
    %178 = vector.broadcast %cst_73 : f32 to vector<8x64xf32>
    %179 = arith.mulf %178, %168 : vector<8x64xf32>
    %180 = arith.subf %177, %179 : vector<8x64xf32>
    %cst_74 = arith.constant 6.250000e-02 : f32
    %181 = vector.broadcast %cst_74 : f32 to vector<8x64xf32>
    %182 = arith.mulf %180, %181 : vector<8x64xf32>
    %cst_75 = arith.constant dense<0x7F800000> : vector<8xf32>
    %183 = vector.multi_reduction <minimumf>, %182, %cst_75 [1] : vector<8x64xf32> to vector<8xf32>
    %184 = vector.shape_cast %183 : vector<8xf32> to vector<8x1xf32>
    %185 = vector.shape_cast %184 : vector<8x1xf32> to vector<1x8x1xf32>
    %cst_76 = arith.constant dense<0.000000e+00> : vector<1xf32>
    %186 = vector.multi_reduction <add>, %185, %cst_76 [1, 2] : vector<1x8x1xf32> to vector<1xf32>
    %187 = vector.shape_cast %186 : vector<1xf32> to vector<1x1x1xf32>
    %188 = vector.extract %187[0, 0, 0] : f32 from vector<1x1x1xf32>
    %189 = vector.broadcast %188 : f32 to vector<1x1xf32>
    %cst_77 = arith.constant 8.000000e+00 : f32
    %190 = vector.broadcast %cst_77 : f32 to vector<1x1xf32>
    %191 = arith.divf %189, %190 : vector<1x1xf32>
    %cst_78 = arith.constant dense<0.000000e+00> : vector<8xf32>
    %192 = vector.multi_reduction <add>, %156, %cst_78 [0] : vector<8x8xf32> to vector<8xf32>
    %193 = vector.shape_cast %192 : vector<8xf32> to vector<1x8xf32>
    %cst_79 = arith.constant 1.250000e-01 : f32
    %194 = vector.broadcast %cst_79 : f32 to vector<1x8xf32>
    %195 = arith.mulf %193, %194 : vector<1x8xf32>
    %196 = vector.broadcast %195 : vector<1x8xf32> to vector<8x8xf32>
    %197 = arith.subf %156, %196 : vector<8x8xf32>
    %cst_80 = arith.constant dense<0.000000e+00> : vector<8x8xf32>
    %198 = tpu.matmul %197, %197, %cst_80 {dimension_numbers = #tpu.dot_dimension_numbers<[0], [0], [1], [1], [0, 1, 1, 1], [], []>} : vector<8x8xf32>, vector<8x8xf32>, vector<8x8xf32> -> vector<8x8xf32>
    %199 = arith.mulf %198, %6 : vector<8x8xf32>
    %cst_81 = arith.constant dense<0.000000e+00> : vector<8xf32>
    %200 = vector.multi_reduction <add>, %199, %cst_81 [0] : vector<8x8xf32> to vector<8xf32>
    %201 = vector.shape_cast %200 : vector<8xf32> to vector<1x8xf32>
    %202 = arith.mulf %198, %6 : vector<8x8xf32>
    %cst_82 = arith.constant dense<0.000000e+00> : vector<8xf32>
    %203 = vector.multi_reduction <add>, %202, %cst_82 [1] : vector<8x8xf32> to vector<8xf32>
    %204 = vector.shape_cast %203 : vector<8xf32> to vector<8x1xf32>
    %cst_83 = arith.constant 1.000000e+00 : f32
    %205 = vector.broadcast %cst_83 : f32 to vector<1x8xf32>
    %206 = arith.divf %205, %201 : vector<1x8xf32>
    %207 = arith.mulf %198, %198 : vector<8x8xf32>
    %208 = vector.broadcast %204 : vector<8x1xf32> to vector<8x8xf32>
    %209 = vector.broadcast %201 : vector<1x8xf32> to vector<8x8xf32>
    %210 = arith.mulf %208, %209 : vector<8x8xf32>
    %211 = arith.divf %207, %210 : vector<8x8xf32>
    %cst_84 = arith.constant dense<0.000000e+00> : vector<8x8xf32>
    %212 = tpu.matmul %6, %14, %cst_84 {dimension_numbers = #tpu.dot_dimension_numbers<[1], [1], [0], [0], [0, 0, 1, 0], [], []>} : vector<8x8xf32>, vector<8x8xf32>, vector<8x8xf32> -> vector<8x8xf32>
    %213 = arith.addf %14, %212 : vector<8x8xf32>
    %214 = tpu.iota {dimensions = array<i32: 0>} : vector<8x8xi32>
    %215 = tpu.iota {dimensions = array<i32: 1>} : vector<8x8xi32>
    %216 = arith.cmpi ne, %214, %215 : vector<8x8xi32>
    %cst_85 = arith.constant 0.000000e+00 : f32
    %217 = vector.broadcast %cst_85 : f32 to vector<8x8xf32>
    %218 = vector.extract_strided_slice %198 {offsets = [0, 0], sizes = [1, 8], strides = [1, 1]} : vector<8x8xf32> to vector<1x8xf32>
    %219 = vector.extract_strided_slice %198 {offsets = [0, 0], sizes = [8, 1], strides = [1, 1]} : vector<8x8xf32> to vector<8x1xf32>
    %220 = vector.extract_strided_slice %206 {offsets = [0, 0], sizes = [1, 1], strides = [1, 1]} : vector<1x8xf32> to vector<1x1xf32>
    %221 = vector.broadcast %220 : vector<1x1xf32> to vector<8x1xf32>
    %222 = arith.mulf %219, %221 : vector<8x1xf32>
    %223 = vector.broadcast %222 : vector<8x1xf32> to vector<8x8xf32>
    %224 = vector.broadcast %218 : vector<1x8xf32> to vector<8x8xf32>
    %225 = arith.mulf %223, %224 : vector<8x8xf32>
    %226 = arith.subf %198, %225 : vector<8x8xf32>
    %c0_i32 = arith.constant 0 : i32
    %227 = vector.broadcast %c0_i32 : i32 to vector<8x8xi32>
    %228 = arith.cmpi ne, %214, %227 : vector<8x8xi32>
    %229 = arith.andi %216, %228 : vector<8x8xi1>
    %c0_i32_86 = arith.constant 0 : i32
    %230 = vector.broadcast %c0_i32_86 : i32 to vector<8x8xi32>
    %231 = arith.cmpi ne, %215, %230 : vector<8x8xi32>
    %232 = arith.andi %229, %231 : vector<8x8xi1>
    %233 = arith.mulf %219, %219 : vector<8x1xf32>
    %234 = vector.broadcast %220 : vector<1x1xf32> to vector<8x1xf32>
    %235 = arith.mulf %233, %234 : vector<8x1xf32>
    %236 = arith.subf %204, %235 : vector<8x1xf32>
    %237 = arith.mulf %218, %218 : vector<1x8xf32>
    %238 = vector.broadcast %220 : vector<1x1xf32> to vector<1x8xf32>
    %239 = arith.mulf %237, %238 : vector<1x8xf32>
    %240 = arith.subf %201, %239 : vector<1x8xf32>
    %241 = vector.broadcast %236 : vector<8x1xf32> to vector<8x8xf32>
    %242 = vector.broadcast %240 : vector<1x8xf32> to vector<8x8xf32>
    %243 = arith.mulf %241, %242 : vector<8x8xf32>
    %cst_87 = arith.constant 1.000000e+00 : f32
    %244 = vector.broadcast %cst_87 : f32 to vector<8x8xf32>
    %245 = arith.select %232, %243, %244 : vector<8x8xi1>, vector<8x8xf32>
    %246 = arith.mulf %226, %226 : vector<8x8xf32>
    %247 = arith.divf %246, %245 : vector<8x8xf32>
    %248 = vector.extract_strided_slice %213 {offsets = [0, 0], sizes = [8, 1], strides = [1, 1]} : vector<8x8xf32> to vector<8x1xf32>
    %249 = vector.extract_strided_slice %14 {offsets = [0, 0], sizes = [1, 8], strides = [1, 1]} : vector<8x8xf32> to vector<1x8xf32>
    %250 = vector.broadcast %248 : vector<8x1xf32> to vector<8x8xf32>
    %251 = vector.broadcast %249 : vector<1x8xf32> to vector<8x8xf32>
    %252 = arith.mulf %250, %251 : vector<8x8xf32>
    %253 = arith.mulf %252, %247 : vector<8x8xf32>
    %cst_88 = arith.constant 1.000000e+00 : f32
    %254 = vector.broadcast %cst_88 : f32 to vector<8x8xf32>
    %255 = arith.subf %254, %252 : vector<8x8xf32>
    %cst_89 = arith.constant 1.000000e+00 : f32
    %256 = vector.broadcast %cst_89 : f32 to vector<8x8xf32>
    %257 = arith.subf %256, %247 : vector<8x8xf32>
    %258 = arith.mulf %255, %257 : vector<8x8xf32>
    %259 = arith.addf %253, %258 : vector<8x8xf32>
    %260 = arith.mulf %259, %211 : vector<8x8xf32>
    %cst_90 = arith.constant 0.000000e+00 : f32
    %261 = vector.broadcast %cst_90 : f32 to vector<8x8xf32>
    %262 = arith.select %232, %260, %261 : vector<8x8xi1>, vector<8x8xf32>
    %263 = arith.addf %217, %262 : vector<8x8xf32>
    %264 = vector.extract_strided_slice %198 {offsets = [1, 0], sizes = [1, 8], strides = [1, 1]} : vector<8x8xf32> to vector<1x8xf32>
    %265 = vector.extract_strided_slice %198 {offsets = [0, 1], sizes = [8, 1], strides = [1, 1]} : vector<8x8xf32> to vector<8x1xf32>
    %266 = vector.extract_strided_slice %206 {offsets = [0, 1], sizes = [1, 1], strides = [1, 1]} : vector<1x8xf32> to vector<1x1xf32>
    %267 = vector.broadcast %266 : vector<1x1xf32> to vector<8x1xf32>
    %268 = arith.mulf %265, %267 : vector<8x1xf32>
    %269 = vector.broadcast %268 : vector<8x1xf32> to vector<8x8xf32>
    %270 = vector.broadcast %264 : vector<1x8xf32> to vector<8x8xf32>
    %271 = arith.mulf %269, %270 : vector<8x8xf32>
    %272 = arith.subf %198, %271 : vector<8x8xf32>
    %c1_i32 = arith.constant 1 : i32
    %273 = vector.broadcast %c1_i32 : i32 to vector<8x8xi32>
    %274 = arith.cmpi ne, %214, %273 : vector<8x8xi32>
    %275 = arith.andi %216, %274 : vector<8x8xi1>
    %c1_i32_91 = arith.constant 1 : i32
    %276 = vector.broadcast %c1_i32_91 : i32 to vector<8x8xi32>
    %277 = arith.cmpi ne, %215, %276 : vector<8x8xi32>
    %278 = arith.andi %275, %277 : vector<8x8xi1>
    %279 = arith.mulf %265, %265 : vector<8x1xf32>
    %280 = vector.broadcast %266 : vector<1x1xf32> to vector<8x1xf32>
    %281 = arith.mulf %279, %280 : vector<8x1xf32>
    %282 = arith.subf %204, %281 : vector<8x1xf32>
    %283 = arith.mulf %264, %264 : vector<1x8xf32>
    %284 = vector.broadcast %266 : vector<1x1xf32> to vector<1x8xf32>
    %285 = arith.mulf %283, %284 : vector<1x8xf32>
    %286 = arith.subf %201, %285 : vector<1x8xf32>
    %287 = vector.broadcast %282 : vector<8x1xf32> to vector<8x8xf32>
    %288 = vector.broadcast %286 : vector<1x8xf32> to vector<8x8xf32>
    %289 = arith.mulf %287, %288 : vector<8x8xf32>
    %cst_92 = arith.constant 1.000000e+00 : f32
    %290 = vector.broadcast %cst_92 : f32 to vector<8x8xf32>
    %291 = arith.select %278, %289, %290 : vector<8x8xi1>, vector<8x8xf32>
    %292 = arith.mulf %272, %272 : vector<8x8xf32>
    %293 = arith.divf %292, %291 : vector<8x8xf32>
    %294 = vector.extract_strided_slice %213 {offsets = [0, 1], sizes = [8, 1], strides = [1, 1]} : vector<8x8xf32> to vector<8x1xf32>
    %295 = vector.extract_strided_slice %14 {offsets = [1, 0], sizes = [1, 8], strides = [1, 1]} : vector<8x8xf32> to vector<1x8xf32>
    %296 = vector.broadcast %294 : vector<8x1xf32> to vector<8x8xf32>
    %297 = vector.broadcast %295 : vector<1x8xf32> to vector<8x8xf32>
    %298 = arith.mulf %296, %297 : vector<8x8xf32>
    %299 = arith.mulf %298, %293 : vector<8x8xf32>
    %cst_93 = arith.constant 1.000000e+00 : f32
    %300 = vector.broadcast %cst_93 : f32 to vector<8x8xf32>
    %301 = arith.subf %300, %298 : vector<8x8xf32>
    %cst_94 = arith.constant 1.000000e+00 : f32
    %302 = vector.broadcast %cst_94 : f32 to vector<8x8xf32>
    %303 = arith.subf %302, %293 : vector<8x8xf32>
    %304 = arith.mulf %301, %303 : vector<8x8xf32>
    %305 = arith.addf %299, %304 : vector<8x8xf32>
    %306 = arith.mulf %305, %211 : vector<8x8xf32>
    %cst_95 = arith.constant 0.000000e+00 : f32
    %307 = vector.broadcast %cst_95 : f32 to vector<8x8xf32>
    %308 = arith.select %278, %306, %307 : vector<8x8xi1>, vector<8x8xf32>
    %309 = arith.addf %263, %308 : vector<8x8xf32>
    %310 = vector.extract_strided_slice %198 {offsets = [2, 0], sizes = [1, 8], strides = [1, 1]} : vector<8x8xf32> to vector<1x8xf32>
    %311 = vector.extract_strided_slice %198 {offsets = [0, 2], sizes = [8, 1], strides = [1, 1]} : vector<8x8xf32> to vector<8x1xf32>
    %312 = vector.extract_strided_slice %206 {offsets = [0, 2], sizes = [1, 1], strides = [1, 1]} : vector<1x8xf32> to vector<1x1xf32>
    %313 = vector.broadcast %312 : vector<1x1xf32> to vector<8x1xf32>
    %314 = arith.mulf %311, %313 : vector<8x1xf32>
    %315 = vector.broadcast %314 : vector<8x1xf32> to vector<8x8xf32>
    %316 = vector.broadcast %310 : vector<1x8xf32> to vector<8x8xf32>
    %317 = arith.mulf %315, %316 : vector<8x8xf32>
    %318 = arith.subf %198, %317 : vector<8x8xf32>
    %c2_i32 = arith.constant 2 : i32
    %319 = vector.broadcast %c2_i32 : i32 to vector<8x8xi32>
    %320 = arith.cmpi ne, %214, %319 : vector<8x8xi32>
    %321 = arith.andi %216, %320 : vector<8x8xi1>
    %c2_i32_96 = arith.constant 2 : i32
    %322 = vector.broadcast %c2_i32_96 : i32 to vector<8x8xi32>
    %323 = arith.cmpi ne, %215, %322 : vector<8x8xi32>
    %324 = arith.andi %321, %323 : vector<8x8xi1>
    %325 = arith.mulf %311, %311 : vector<8x1xf32>
    %326 = vector.broadcast %312 : vector<1x1xf32> to vector<8x1xf32>
    %327 = arith.mulf %325, %326 : vector<8x1xf32>
    %328 = arith.subf %204, %327 : vector<8x1xf32>
    %329 = arith.mulf %310, %310 : vector<1x8xf32>
    %330 = vector.broadcast %312 : vector<1x1xf32> to vector<1x8xf32>
    %331 = arith.mulf %329, %330 : vector<1x8xf32>
    %332 = arith.subf %201, %331 : vector<1x8xf32>
    %333 = vector.broadcast %328 : vector<8x1xf32> to vector<8x8xf32>
    %334 = vector.broadcast %332 : vector<1x8xf32> to vector<8x8xf32>
    %335 = arith.mulf %333, %334 : vector<8x8xf32>
    %cst_97 = arith.constant 1.000000e+00 : f32
    %336 = vector.broadcast %cst_97 : f32 to vector<8x8xf32>
    %337 = arith.select %324, %335, %336 : vector<8x8xi1>, vector<8x8xf32>
    %338 = arith.mulf %318, %318 : vector<8x8xf32>
    %339 = arith.divf %338, %337 : vector<8x8xf32>
    %340 = vector.extract_strided_slice %213 {offsets = [0, 2], sizes = [8, 1], strides = [1, 1]} : vector<8x8xf32> to vector<8x1xf32>
    %341 = vector.extract_strided_slice %14 {offsets = [2, 0], sizes = [1, 8], strides = [1, 1]} : vector<8x8xf32> to vector<1x8xf32>
    %342 = vector.broadcast %340 : vector<8x1xf32> to vector<8x8xf32>
    %343 = vector.broadcast %341 : vector<1x8xf32> to vector<8x8xf32>
    %344 = arith.mulf %342, %343 : vector<8x8xf32>
    %345 = arith.mulf %344, %339 : vector<8x8xf32>
    %cst_98 = arith.constant 1.000000e+00 : f32
    %346 = vector.broadcast %cst_98 : f32 to vector<8x8xf32>
    %347 = arith.subf %346, %344 : vector<8x8xf32>
    %cst_99 = arith.constant 1.000000e+00 : f32
    %348 = vector.broadcast %cst_99 : f32 to vector<8x8xf32>
    %349 = arith.subf %348, %339 : vector<8x8xf32>
    %350 = arith.mulf %347, %349 : vector<8x8xf32>
    %351 = arith.addf %345, %350 : vector<8x8xf32>
    %352 = arith.mulf %351, %211 : vector<8x8xf32>
    %cst_100 = arith.constant 0.000000e+00 : f32
    %353 = vector.broadcast %cst_100 : f32 to vector<8x8xf32>
    %354 = arith.select %324, %352, %353 : vector<8x8xi1>, vector<8x8xf32>
    %355 = arith.addf %309, %354 : vector<8x8xf32>
    %356 = vector.extract_strided_slice %198 {offsets = [3, 0], sizes = [1, 8], strides = [1, 1]} : vector<8x8xf32> to vector<1x8xf32>
    %357 = vector.extract_strided_slice %198 {offsets = [0, 3], sizes = [8, 1], strides = [1, 1]} : vector<8x8xf32> to vector<8x1xf32>
    %358 = vector.extract_strided_slice %206 {offsets = [0, 3], sizes = [1, 1], strides = [1, 1]} : vector<1x8xf32> to vector<1x1xf32>
    %359 = vector.broadcast %358 : vector<1x1xf32> to vector<8x1xf32>
    %360 = arith.mulf %357, %359 : vector<8x1xf32>
    %361 = vector.broadcast %360 : vector<8x1xf32> to vector<8x8xf32>
    %362 = vector.broadcast %356 : vector<1x8xf32> to vector<8x8xf32>
    %363 = arith.mulf %361, %362 : vector<8x8xf32>
    %364 = arith.subf %198, %363 : vector<8x8xf32>
    %c3_i32 = arith.constant 3 : i32
    %365 = vector.broadcast %c3_i32 : i32 to vector<8x8xi32>
    %366 = arith.cmpi ne, %214, %365 : vector<8x8xi32>
    %367 = arith.andi %216, %366 : vector<8x8xi1>
    %c3_i32_101 = arith.constant 3 : i32
    %368 = vector.broadcast %c3_i32_101 : i32 to vector<8x8xi32>
    %369 = arith.cmpi ne, %215, %368 : vector<8x8xi32>
    %370 = arith.andi %367, %369 : vector<8x8xi1>
    %371 = arith.mulf %357, %357 : vector<8x1xf32>
    %372 = vector.broadcast %358 : vector<1x1xf32> to vector<8x1xf32>
    %373 = arith.mulf %371, %372 : vector<8x1xf32>
    %374 = arith.subf %204, %373 : vector<8x1xf32>
    %375 = arith.mulf %356, %356 : vector<1x8xf32>
    %376 = vector.broadcast %358 : vector<1x1xf32> to vector<1x8xf32>
    %377 = arith.mulf %375, %376 : vector<1x8xf32>
    %378 = arith.subf %201, %377 : vector<1x8xf32>
    %379 = vector.broadcast %374 : vector<8x1xf32> to vector<8x8xf32>
    %380 = vector.broadcast %378 : vector<1x8xf32> to vector<8x8xf32>
    %381 = arith.mulf %379, %380 : vector<8x8xf32>
    %cst_102 = arith.constant 1.000000e+00 : f32
    %382 = vector.broadcast %cst_102 : f32 to vector<8x8xf32>
    %383 = arith.select %370, %381, %382 : vector<8x8xi1>, vector<8x8xf32>
    %384 = arith.mulf %364, %364 : vector<8x8xf32>
    %385 = arith.divf %384, %383 : vector<8x8xf32>
    %386 = vector.extract_strided_slice %213 {offsets = [0, 3], sizes = [8, 1], strides = [1, 1]} : vector<8x8xf32> to vector<8x1xf32>
    %387 = vector.extract_strided_slice %14 {offsets = [3, 0], sizes = [1, 8], strides = [1, 1]} : vector<8x8xf32> to vector<1x8xf32>
    %388 = vector.broadcast %386 : vector<8x1xf32> to vector<8x8xf32>
    %389 = vector.broadcast %387 : vector<1x8xf32> to vector<8x8xf32>
    %390 = arith.mulf %388, %389 : vector<8x8xf32>
    %391 = arith.mulf %390, %385 : vector<8x8xf32>
    %cst_103 = arith.constant 1.000000e+00 : f32
    %392 = vector.broadcast %cst_103 : f32 to vector<8x8xf32>
    %393 = arith.subf %392, %390 : vector<8x8xf32>
    %cst_104 = arith.constant 1.000000e+00 : f32
    %394 = vector.broadcast %cst_104 : f32 to vector<8x8xf32>
    %395 = arith.subf %394, %385 : vector<8x8xf32>
    %396 = arith.mulf %393, %395 : vector<8x8xf32>
    %397 = arith.addf %391, %396 : vector<8x8xf32>
    %398 = arith.mulf %397, %211 : vector<8x8xf32>
    %cst_105 = arith.constant 0.000000e+00 : f32
    %399 = vector.broadcast %cst_105 : f32 to vector<8x8xf32>
    %400 = arith.select %370, %398, %399 : vector<8x8xi1>, vector<8x8xf32>
    %401 = arith.addf %355, %400 : vector<8x8xf32>
    %402 = vector.extract_strided_slice %198 {offsets = [4, 0], sizes = [1, 8], strides = [1, 1]} : vector<8x8xf32> to vector<1x8xf32>
    %403 = vector.extract_strided_slice %198 {offsets = [0, 4], sizes = [8, 1], strides = [1, 1]} : vector<8x8xf32> to vector<8x1xf32>
    %404 = vector.extract_strided_slice %206 {offsets = [0, 4], sizes = [1, 1], strides = [1, 1]} : vector<1x8xf32> to vector<1x1xf32>
    %405 = vector.broadcast %404 : vector<1x1xf32> to vector<8x1xf32>
    %406 = arith.mulf %403, %405 : vector<8x1xf32>
    %407 = vector.broadcast %406 : vector<8x1xf32> to vector<8x8xf32>
    %408 = vector.broadcast %402 : vector<1x8xf32> to vector<8x8xf32>
    %409 = arith.mulf %407, %408 : vector<8x8xf32>
    %410 = arith.subf %198, %409 : vector<8x8xf32>
    %c4_i32 = arith.constant 4 : i32
    %411 = vector.broadcast %c4_i32 : i32 to vector<8x8xi32>
    %412 = arith.cmpi ne, %214, %411 : vector<8x8xi32>
    %413 = arith.andi %216, %412 : vector<8x8xi1>
    %c4_i32_106 = arith.constant 4 : i32
    %414 = vector.broadcast %c4_i32_106 : i32 to vector<8x8xi32>
    %415 = arith.cmpi ne, %215, %414 : vector<8x8xi32>
    %416 = arith.andi %413, %415 : vector<8x8xi1>
    %417 = arith.mulf %403, %403 : vector<8x1xf32>
    %418 = vector.broadcast %404 : vector<1x1xf32> to vector<8x1xf32>
    %419 = arith.mulf %417, %418 : vector<8x1xf32>
    %420 = arith.subf %204, %419 : vector<8x1xf32>
    %421 = arith.mulf %402, %402 : vector<1x8xf32>
    %422 = vector.broadcast %404 : vector<1x1xf32> to vector<1x8xf32>
    %423 = arith.mulf %421, %422 : vector<1x8xf32>
    %424 = arith.subf %201, %423 : vector<1x8xf32>
    %425 = vector.broadcast %420 : vector<8x1xf32> to vector<8x8xf32>
    %426 = vector.broadcast %424 : vector<1x8xf32> to vector<8x8xf32>
    %427 = arith.mulf %425, %426 : vector<8x8xf32>
    %cst_107 = arith.constant 1.000000e+00 : f32
    %428 = vector.broadcast %cst_107 : f32 to vector<8x8xf32>
    %429 = arith.select %416, %427, %428 : vector<8x8xi1>, vector<8x8xf32>
    %430 = arith.mulf %410, %410 : vector<8x8xf32>
    %431 = arith.divf %430, %429 : vector<8x8xf32>
    %432 = vector.extract_strided_slice %213 {offsets = [0, 4], sizes = [8, 1], strides = [1, 1]} : vector<8x8xf32> to vector<8x1xf32>
    %433 = vector.extract_strided_slice %14 {offsets = [4, 0], sizes = [1, 8], strides = [1, 1]} : vector<8x8xf32> to vector<1x8xf32>
    %434 = vector.broadcast %432 : vector<8x1xf32> to vector<8x8xf32>
    %435 = vector.broadcast %433 : vector<1x8xf32> to vector<8x8xf32>
    %436 = arith.mulf %434, %435 : vector<8x8xf32>
    %437 = arith.mulf %436, %431 : vector<8x8xf32>
    %cst_108 = arith.constant 1.000000e+00 : f32
    %438 = vector.broadcast %cst_108 : f32 to vector<8x8xf32>
    %439 = arith.subf %438, %436 : vector<8x8xf32>
    %cst_109 = arith.constant 1.000000e+00 : f32
    %440 = vector.broadcast %cst_109 : f32 to vector<8x8xf32>
    %441 = arith.subf %440, %431 : vector<8x8xf32>
    %442 = arith.mulf %439, %441 : vector<8x8xf32>
    %443 = arith.addf %437, %442 : vector<8x8xf32>
    %444 = arith.mulf %443, %211 : vector<8x8xf32>
    %cst_110 = arith.constant 0.000000e+00 : f32
    %445 = vector.broadcast %cst_110 : f32 to vector<8x8xf32>
    %446 = arith.select %416, %444, %445 : vector<8x8xi1>, vector<8x8xf32>
    %447 = arith.addf %401, %446 : vector<8x8xf32>
    %448 = vector.extract_strided_slice %198 {offsets = [5, 0], sizes = [1, 8], strides = [1, 1]} : vector<8x8xf32> to vector<1x8xf32>
    %449 = vector.extract_strided_slice %198 {offsets = [0, 5], sizes = [8, 1], strides = [1, 1]} : vector<8x8xf32> to vector<8x1xf32>
    %450 = vector.extract_strided_slice %206 {offsets = [0, 5], sizes = [1, 1], strides = [1, 1]} : vector<1x8xf32> to vector<1x1xf32>
    %451 = vector.broadcast %450 : vector<1x1xf32> to vector<8x1xf32>
    %452 = arith.mulf %449, %451 : vector<8x1xf32>
    %453 = vector.broadcast %452 : vector<8x1xf32> to vector<8x8xf32>
    %454 = vector.broadcast %448 : vector<1x8xf32> to vector<8x8xf32>
    %455 = arith.mulf %453, %454 : vector<8x8xf32>
    %456 = arith.subf %198, %455 : vector<8x8xf32>
    %c5_i32 = arith.constant 5 : i32
    %457 = vector.broadcast %c5_i32 : i32 to vector<8x8xi32>
    %458 = arith.cmpi ne, %214, %457 : vector<8x8xi32>
    %459 = arith.andi %216, %458 : vector<8x8xi1>
    %c5_i32_111 = arith.constant 5 : i32
    %460 = vector.broadcast %c5_i32_111 : i32 to vector<8x8xi32>
    %461 = arith.cmpi ne, %215, %460 : vector<8x8xi32>
    %462 = arith.andi %459, %461 : vector<8x8xi1>
    %463 = arith.mulf %449, %449 : vector<8x1xf32>
    %464 = vector.broadcast %450 : vector<1x1xf32> to vector<8x1xf32>
    %465 = arith.mulf %463, %464 : vector<8x1xf32>
    %466 = arith.subf %204, %465 : vector<8x1xf32>
    %467 = arith.mulf %448, %448 : vector<1x8xf32>
    %468 = vector.broadcast %450 : vector<1x1xf32> to vector<1x8xf32>
    %469 = arith.mulf %467, %468 : vector<1x8xf32>
    %470 = arith.subf %201, %469 : vector<1x8xf32>
    %471 = vector.broadcast %466 : vector<8x1xf32> to vector<8x8xf32>
    %472 = vector.broadcast %470 : vector<1x8xf32> to vector<8x8xf32>
    %473 = arith.mulf %471, %472 : vector<8x8xf32>
    %cst_112 = arith.constant 1.000000e+00 : f32
    %474 = vector.broadcast %cst_112 : f32 to vector<8x8xf32>
    %475 = arith.select %462, %473, %474 : vector<8x8xi1>, vector<8x8xf32>
    %476 = arith.mulf %456, %456 : vector<8x8xf32>
    %477 = arith.divf %476, %475 : vector<8x8xf32>
    %478 = vector.extract_strided_slice %213 {offsets = [0, 5], sizes = [8, 1], strides = [1, 1]} : vector<8x8xf32> to vector<8x1xf32>
    %479 = vector.extract_strided_slice %14 {offsets = [5, 0], sizes = [1, 8], strides = [1, 1]} : vector<8x8xf32> to vector<1x8xf32>
    %480 = vector.broadcast %478 : vector<8x1xf32> to vector<8x8xf32>
    %481 = vector.broadcast %479 : vector<1x8xf32> to vector<8x8xf32>
    %482 = arith.mulf %480, %481 : vector<8x8xf32>
    %483 = arith.mulf %482, %477 : vector<8x8xf32>
    %cst_113 = arith.constant 1.000000e+00 : f32
    %484 = vector.broadcast %cst_113 : f32 to vector<8x8xf32>
    %485 = arith.subf %484, %482 : vector<8x8xf32>
    %cst_114 = arith.constant 1.000000e+00 : f32
    %486 = vector.broadcast %cst_114 : f32 to vector<8x8xf32>
    %487 = arith.subf %486, %477 : vector<8x8xf32>
    %488 = arith.mulf %485, %487 : vector<8x8xf32>
    %489 = arith.addf %483, %488 : vector<8x8xf32>
    %490 = arith.mulf %489, %211 : vector<8x8xf32>
    %cst_115 = arith.constant 0.000000e+00 : f32
    %491 = vector.broadcast %cst_115 : f32 to vector<8x8xf32>
    %492 = arith.select %462, %490, %491 : vector<8x8xi1>, vector<8x8xf32>
    %493 = arith.addf %447, %492 : vector<8x8xf32>
    %494 = vector.extract_strided_slice %198 {offsets = [6, 0], sizes = [1, 8], strides = [1, 1]} : vector<8x8xf32> to vector<1x8xf32>
    %495 = vector.extract_strided_slice %198 {offsets = [0, 6], sizes = [8, 1], strides = [1, 1]} : vector<8x8xf32> to vector<8x1xf32>
    %496 = vector.extract_strided_slice %206 {offsets = [0, 6], sizes = [1, 1], strides = [1, 1]} : vector<1x8xf32> to vector<1x1xf32>
    %497 = vector.broadcast %496 : vector<1x1xf32> to vector<8x1xf32>
    %498 = arith.mulf %495, %497 : vector<8x1xf32>
    %499 = vector.broadcast %498 : vector<8x1xf32> to vector<8x8xf32>
    %500 = vector.broadcast %494 : vector<1x8xf32> to vector<8x8xf32>
    %501 = arith.mulf %499, %500 : vector<8x8xf32>
    %502 = arith.subf %198, %501 : vector<8x8xf32>
    %c6_i32 = arith.constant 6 : i32
    %503 = vector.broadcast %c6_i32 : i32 to vector<8x8xi32>
    %504 = arith.cmpi ne, %214, %503 : vector<8x8xi32>
    %505 = arith.andi %216, %504 : vector<8x8xi1>
    %c6_i32_116 = arith.constant 6 : i32
    %506 = vector.broadcast %c6_i32_116 : i32 to vector<8x8xi32>
    %507 = arith.cmpi ne, %215, %506 : vector<8x8xi32>
    %508 = arith.andi %505, %507 : vector<8x8xi1>
    %509 = arith.mulf %495, %495 : vector<8x1xf32>
    %510 = vector.broadcast %496 : vector<1x1xf32> to vector<8x1xf32>
    %511 = arith.mulf %509, %510 : vector<8x1xf32>
    %512 = arith.subf %204, %511 : vector<8x1xf32>
    %513 = arith.mulf %494, %494 : vector<1x8xf32>
    %514 = vector.broadcast %496 : vector<1x1xf32> to vector<1x8xf32>
    %515 = arith.mulf %513, %514 : vector<1x8xf32>
    %516 = arith.subf %201, %515 : vector<1x8xf32>
    %517 = vector.broadcast %512 : vector<8x1xf32> to vector<8x8xf32>
    %518 = vector.broadcast %516 : vector<1x8xf32> to vector<8x8xf32>
    %519 = arith.mulf %517, %518 : vector<8x8xf32>
    %cst_117 = arith.constant 1.000000e+00 : f32
    %520 = vector.broadcast %cst_117 : f32 to vector<8x8xf32>
    %521 = arith.select %508, %519, %520 : vector<8x8xi1>, vector<8x8xf32>
    %522 = arith.mulf %502, %502 : vector<8x8xf32>
    %523 = arith.divf %522, %521 : vector<8x8xf32>
    %524 = vector.extract_strided_slice %213 {offsets = [0, 6], sizes = [8, 1], strides = [1, 1]} : vector<8x8xf32> to vector<8x1xf32>
    %525 = vector.extract_strided_slice %14 {offsets = [6, 0], sizes = [1, 8], strides = [1, 1]} : vector<8x8xf32> to vector<1x8xf32>
    %526 = vector.broadcast %524 : vector<8x1xf32> to vector<8x8xf32>
    %527 = vector.broadcast %525 : vector<1x8xf32> to vector<8x8xf32>
    %528 = arith.mulf %526, %527 : vector<8x8xf32>
    %529 = arith.mulf %528, %523 : vector<8x8xf32>
    %cst_118 = arith.constant 1.000000e+00 : f32
    %530 = vector.broadcast %cst_118 : f32 to vector<8x8xf32>
    %531 = arith.subf %530, %528 : vector<8x8xf32>
    %cst_119 = arith.constant 1.000000e+00 : f32
    %532 = vector.broadcast %cst_119 : f32 to vector<8x8xf32>
    %533 = arith.subf %532, %523 : vector<8x8xf32>
    %534 = arith.mulf %531, %533 : vector<8x8xf32>
    %535 = arith.addf %529, %534 : vector<8x8xf32>
    %536 = arith.mulf %535, %211 : vector<8x8xf32>
    %cst_120 = arith.constant 0.000000e+00 : f32
    %537 = vector.broadcast %cst_120 : f32 to vector<8x8xf32>
    %538 = arith.select %508, %536, %537 : vector<8x8xi1>, vector<8x8xf32>
    %539 = arith.addf %493, %538 : vector<8x8xf32>
    %540 = vector.extract_strided_slice %198 {offsets = [7, 0], sizes = [1, 8], strides = [1, 1]} : vector<8x8xf32> to vector<1x8xf32>
    %541 = vector.extract_strided_slice %198 {offsets = [0, 7], sizes = [8, 1], strides = [1, 1]} : vector<8x8xf32> to vector<8x1xf32>
    %542 = vector.extract_strided_slice %206 {offsets = [0, 7], sizes = [1, 1], strides = [1, 1]} : vector<1x8xf32> to vector<1x1xf32>
    %543 = vector.broadcast %542 : vector<1x1xf32> to vector<8x1xf32>
    %544 = arith.mulf %541, %543 : vector<8x1xf32>
    %545 = vector.broadcast %544 : vector<8x1xf32> to vector<8x8xf32>
    %546 = vector.broadcast %540 : vector<1x8xf32> to vector<8x8xf32>
    %547 = arith.mulf %545, %546 : vector<8x8xf32>
    %548 = arith.subf %198, %547 : vector<8x8xf32>
    %c7_i32 = arith.constant 7 : i32
    %549 = vector.broadcast %c7_i32 : i32 to vector<8x8xi32>
    %550 = arith.cmpi ne, %214, %549 : vector<8x8xi32>
    %551 = arith.andi %216, %550 : vector<8x8xi1>
    %c7_i32_121 = arith.constant 7 : i32
    %552 = vector.broadcast %c7_i32_121 : i32 to vector<8x8xi32>
    %553 = arith.cmpi ne, %215, %552 : vector<8x8xi32>
    %554 = arith.andi %551, %553 : vector<8x8xi1>
    %555 = arith.mulf %541, %541 : vector<8x1xf32>
    %556 = vector.broadcast %542 : vector<1x1xf32> to vector<8x1xf32>
    %557 = arith.mulf %555, %556 : vector<8x1xf32>
    %558 = arith.subf %204, %557 : vector<8x1xf32>
    %559 = arith.mulf %540, %540 : vector<1x8xf32>
    %560 = vector.broadcast %542 : vector<1x1xf32> to vector<1x8xf32>
    %561 = arith.mulf %559, %560 : vector<1x8xf32>
    %562 = arith.subf %201, %561 : vector<1x8xf32>
    %563 = vector.broadcast %558 : vector<8x1xf32> to vector<8x8xf32>
    %564 = vector.broadcast %562 : vector<1x8xf32> to vector<8x8xf32>
    %565 = arith.mulf %563, %564 : vector<8x8xf32>
    %cst_122 = arith.constant 1.000000e+00 : f32
    %566 = vector.broadcast %cst_122 : f32 to vector<8x8xf32>
    %567 = arith.select %554, %565, %566 : vector<8x8xi1>, vector<8x8xf32>
    %568 = arith.mulf %548, %548 : vector<8x8xf32>
    %569 = arith.divf %568, %567 : vector<8x8xf32>
    %570 = vector.extract_strided_slice %213 {offsets = [0, 7], sizes = [8, 1], strides = [1, 1]} : vector<8x8xf32> to vector<8x1xf32>
    %571 = vector.extract_strided_slice %14 {offsets = [7, 0], sizes = [1, 8], strides = [1, 1]} : vector<8x8xf32> to vector<1x8xf32>
    %572 = vector.broadcast %570 : vector<8x1xf32> to vector<8x8xf32>
    %573 = vector.broadcast %571 : vector<1x8xf32> to vector<8x8xf32>
    %574 = arith.mulf %572, %573 : vector<8x8xf32>
    %575 = arith.mulf %574, %569 : vector<8x8xf32>
    %cst_123 = arith.constant 1.000000e+00 : f32
    %576 = vector.broadcast %cst_123 : f32 to vector<8x8xf32>
    %577 = arith.subf %576, %574 : vector<8x8xf32>
    %cst_124 = arith.constant 1.000000e+00 : f32
    %578 = vector.broadcast %cst_124 : f32 to vector<8x8xf32>
    %579 = arith.subf %578, %569 : vector<8x8xf32>
    %580 = arith.mulf %577, %579 : vector<8x8xf32>
    %581 = arith.addf %575, %580 : vector<8x8xf32>
    %582 = arith.mulf %581, %211 : vector<8x8xf32>
    %cst_125 = arith.constant 0.000000e+00 : f32
    %583 = vector.broadcast %cst_125 : f32 to vector<8x8xf32>
    %584 = arith.select %554, %582, %583 : vector<8x8xi1>, vector<8x8xf32>
    %585 = arith.addf %539, %584 : vector<8x8xf32>
    %586 = vector.shape_cast %585 : vector<8x8xf32> to vector<1x8x8xf32>
    %cst_126 = arith.constant dense<0.000000e+00> : vector<1xf32>
    %587 = vector.multi_reduction <add>, %586, %cst_126 [1, 2] : vector<1x8x8xf32> to vector<1xf32>
    %588 = vector.shape_cast %587 : vector<1xf32> to vector<1x1x1xf32>
    %589 = vector.extract %588[0, 0, 0] : f32 from vector<1x1x1xf32>
    %590 = vector.broadcast %589 : f32 to vector<1x1xf32>
    %cst_127 = arith.constant 0.000000e+00 : f32
    %591 = vector.broadcast %cst_127 : f32 to vector<1x128xf32>
    %c0_i32_128 = arith.constant 0 : i32
    %592 = vector.broadcast %c0_i32_128 : i32 to vector<1x128xi32>
    %593 = arith.cmpi eq, %0, %592 : vector<1x128xi32>
    %594 = arith.extui %593 : vector<1x128xi1> to vector<1x128xi32>
    %595 = arith.sitofp %594 : vector<1x128xi32> to vector<1x128xf32>
    %596 = vector.broadcast %23 : vector<1x1xf32> to vector<1x128xf32>
    %597 = arith.mulf %596, %595 : vector<1x128xf32>
    %598 = arith.addf %591, %597 : vector<1x128xf32>
    %c1_i32_129 = arith.constant 1 : i32
    %599 = vector.broadcast %c1_i32_129 : i32 to vector<1x128xi32>
    %600 = arith.cmpi eq, %0, %599 : vector<1x128xi32>
    %601 = arith.extui %600 : vector<1x128xi1> to vector<1x128xi32>
    %602 = arith.sitofp %601 : vector<1x128xi32> to vector<1x128xf32>
    %603 = vector.broadcast %166 : vector<1x1xf32> to vector<1x128xf32>
    %604 = arith.mulf %603, %602 : vector<1x128xf32>
    %605 = arith.addf %598, %604 : vector<1x128xf32>
    %c2_i32_130 = arith.constant 2 : i32
    %606 = vector.broadcast %c2_i32_130 : i32 to vector<1x128xi32>
    %607 = arith.cmpi eq, %0, %606 : vector<1x128xi32>
    %608 = arith.extui %607 : vector<1x128xi1> to vector<1x128xi32>
    %609 = arith.sitofp %608 : vector<1x128xi32> to vector<1x128xf32>
    %610 = vector.broadcast %191 : vector<1x1xf32> to vector<1x128xf32>
    %611 = arith.mulf %610, %609 : vector<1x128xf32>
    %612 = arith.addf %605, %611 : vector<1x128xf32>
    %c3_i32_131 = arith.constant 3 : i32
    %613 = vector.broadcast %c3_i32_131 : i32 to vector<1x128xi32>
    %614 = arith.cmpi eq, %0, %613 : vector<1x128xi32>
    %615 = arith.extui %614 : vector<1x128xi1> to vector<1x128xi32>
    %616 = arith.sitofp %615 : vector<1x128xi32> to vector<1x128xf32>
    %617 = vector.broadcast %590 : vector<1x1xf32> to vector<1x128xf32>
    %618 = arith.mulf %617, %616 : vector<1x128xf32>
    %619 = arith.addf %612, %618 : vector<1x128xf32>
    %c0_132 = arith.constant 0 : index
    %c0_133 = arith.constant 0 : index
    %620 = vector.load %arg17[%c0_132, %c0_133] : memref<1x128xf32, #tpu.memory_space<vmem>>, vector<1x128xf32>
    tpu.vector_store %arg17[%c0_132, %c0_133], %619 {strides = array<i32>} : memref<1x128xf32, #tpu.memory_space<vmem>>, vector<1x128xf32>,
    return
  }
  func.func @transform_0(%arg0: i32) -> (i32, i32) {
    %c0_i32 = arith.constant 0 : i32
    %c0_i32_0 = arith.constant 0 : i32
    %c0_i32_1 = arith.constant 0 : i32
    return %c0_i32, %c0_i32_0 : i32, i32
  }
  func.func @transform_1(%arg0: i32) -> (i32, i32) {
    %c0_i32 = arith.constant 0 : i32
    %c0_i32_0 = arith.constant 0 : i32
    %c0_i32_1 = arith.constant 0 : i32
    return %c0_i32, %c0_i32_0 : i32, i32
  }
  func.func @transform_2(%arg0: i32) -> (i32, i32) {
    %c0_i32 = arith.constant 0 : i32
    %c0_i32_0 = arith.constant 0 : i32
    %c0_i32_1 = arith.constant 0 : i32
    return %c0_i32, %c0_i32_0 : i32, i32
  }
  func.func @transform_3(%arg0: i32) -> (i32, i32) {
    %c0_i32 = arith.constant 0 : i32
    %c0_i32_0 = arith.constant 0 : i32
    %c0_i32_1 = arith.constant 0 : i32
    return %c0_i32, %c0_i32_0 : i32, i32
  }
  func.func @transform_4(%arg0: i32) -> (i32, i32) {
    %c0_i32 = arith.constant 0 : i32
    %c0_i32_0 = arith.constant 0 : i32
    %c0_i32_1 = arith.constant 0 : i32
    return %c0_i32, %c0_i32_0 : i32, i32
  }
  func.func @transform_5(%arg0: i32) -> (i32, i32) {
    %c0_i32 = arith.constant 0 : i32
    %c0_i32_0 = arith.constant 0 : i32
    %c0_i32_1 = arith.constant 0 : i32
    return %c0_i32, %c0_i32_0 : i32, i32
  }
  func.func @transform_6(%arg0: i32) -> (i32, i32) {
    %c0_i32 = arith.constant 0 : i32
    %c0_i32_0 = arith.constant 0 : i32
    %c0_i32_1 = arith.constant 0 : i32
    return %c0_i32, %c0_i32_0 : i32, i32
  }
  func.func @transform_7(%arg0: i32) -> (i32, i32) {
    %c0_i32 = arith.constant 0 : i32
    %c0_i32_0 = arith.constant 0 : i32
    %c0_i32_1 = arith.constant 0 : i32
    return %c0_i32, %c0_i32_0 : i32, i32
  }
  func.func @transform_8(%arg0: i32) -> (i32, i32) {
    %c0_i32 = arith.constant 0 : i32
    %c0_i32_0 = arith.constant 0 : i32
    %c0_i32_1 = arith.constant 0 : i32
    return %c0_i32, %c0_i32_0 : i32, i32
  }
  func.func @transform_9(%arg0: i32) -> (i32, i32) {
    %c0_i32 = arith.constant 0 : i32
    %c0_i32_0 = arith.constant 0 : i32
    %c0_i32_1 = arith.constant 0 : i32
    return %c0_i32, %c0_i32_0 : i32, i32
  }
  func.func @transform_10(%arg0: i32) -> (i32, i32) {
    %c0_i32 = arith.constant 0 : i32
    %c0_i32_0 = arith.constant 0 : i32
    %c0_i32_1 = arith.constant 0 : i32
    return %c0_i32, %c0_i32_0 : i32, i32
  }
  func.func @transform_11(%arg0: i32) -> (i32, i32) {
    %c0_i32 = arith.constant 0 : i32
    %c0_i32_0 = arith.constant 0 : i32
    %c0_i32_1 = arith.constant 0 : i32
    return %c0_i32, %c0_i32_0 : i32, i32
  }
  func.func @transform_12(%arg0: i32) -> (i32, i32) {
    %c0_i32 = arith.constant 0 : i32
    %c0_i32_0 = arith.constant 0 : i32
    %c0_i32_1 = arith.constant 0 : i32
    return %c0_i32, %c0_i32_0 : i32, i32
  }
  func.func @transform_13(%arg0: i32) -> (i32, i32) {
    %c0_i32 = arith.constant 0 : i32
    %c0_i32_0 = arith.constant 0 : i32
    %c0_i32_1 = arith.constant 0 : i32
    return %c0_i32, %c0_i32_0 : i32, i32
  }
  func.func @transform_14(%arg0: i32) -> (i32, i32) {
    %c0_i32 = arith.constant 0 : i32
    %c0_i32_0 = arith.constant 0 : i32
    %c0_i32_1 = arith.constant 0 : i32
    return %c0_i32, %c0_i32_0 : i32, i32
  }
  func.func @transform_15(%arg0: i32) -> (i32, i32) {
    %c0_i32 = arith.constant 0 : i32
    %c0_i32_0 = arith.constant 0 : i32
    %c0_i32_1 = arith.constant 0 : i32
    return %c0_i32, %c0_i32_0 : i32, i32
  }
  func.func @transform_16(%arg0: i32) -> (i32, i32) {
    %c0_i32 = arith.constant 0 : i32
    %c0_i32_0 = arith.constant 0 : i32
    return %arg0, %c0_i32 : i32, i32
  }
}

</mosaic_0001>

<llo_original>
// kernel: tpu_custom_call.1
$region0: #{tpu_custom_call.1}
  #allocation0 [shape = 'u32[]', space=smem, size = 0x4, offset = 0x4, fixed_abs, tag = 'smem constant byte address 0x4 - core index']
  #allocation1 [shape = 'u32[144,128]{1,0:T(1,128)}', space=vmem, size = 0x12000, scoped, tag = 'internal scratch']
  %s0 = inlined_call_operand.vmem [shape: f32[8,8], index: 0, kind: input, shape index: {}]
  %s1 = inlined_call_operand.vmem [shape: f32[64,16], index: 1, kind: input, shape index: {}]
  %s2 = inlined_call_operand.vmem [shape: f32[64,16], index: 2, kind: input, shape index: {}]
  %s3 = inlined_call_operand.vmem [shape: f32[64,8], index: 3, kind: input, shape index: {}]
  %s4 = inlined_call_operand.vmem [shape: f32[8,8], index: 4, kind: input, shape index: {}]
  %s5 = inlined_call_operand.vmem [shape: f32[8,8], index: 5, kind: input, shape index: {}]
  %s6 = inlined_call_operand.vmem [shape: f32[16,32], index: 6, kind: input, shape index: {}]
  %s7 = inlined_call_operand.vmem [shape: f32[1,32], index: 7, kind: input, shape index: {}]
  %s8 = inlined_call_operand.vmem [shape: f32[1,32], index: 8, kind: input, shape index: {}]
  %s9 = inlined_call_operand.vmem [shape: f32[32,8], index: 9, kind: input, shape index: {}]
  %s10 = inlined_call_operand.vmem [shape: f32[1,8], index: 10, kind: input, shape index: {}]
  %s11 = inlined_call_operand.vmem [shape: f32[8,32], index: 11, kind: input, shape index: {}]
  %s12 = inlined_call_operand.vmem [shape: f32[1,32], index: 12, kind: input, shape index: {}]
  %s13 = inlined_call_operand.vmem [shape: f32[1,32], index: 13, kind: input, shape index: {}]
  %s14 = inlined_call_operand.vmem [shape: f32[32,16], index: 14, kind: input, shape index: {}]
  %s15 = inlined_call_operand.vmem [shape: f32[1,16], index: 15, kind: input, shape index: {}]
  %s16 = inlined_call_operand.hbm [shape: f32[1,128], index: 16, kind: output, shape index: {}]
  %s17 = sld [smem:[#allocation0]]
  $region74: #{tpu_custom_call.1} parent=0
    _
  %s19 = ssub.s32 1, %s17
  %s20 = scalar_select 0, %s19, %s17
  $region1: #{tpu_custom_call.1} parent=0
    #allocation2 [shape = 'u8[512]{0}', space=vmem, size = 0x400, scoped, tag = 'output window, operand 0, single buffered']
    #allocation3 [shape = 's32[1]{0}', space=sflag, size = 0x4, scoped, tag = 'scoped memory for tpu_custom_call.1']
    %21 = vsyncpa [#allocation3], 0
    // Predicated region
    $region2: #{tpu_custom_call.1} parent=1 // pred_check
      _
    $region3: #{tpu_custom_call.1} parent=1 // pred_check_branch
      %23 = sbr.rel (0) target = $region5
    $region4: #{tpu_custom_call.1} parent=1 // pred_region
      _
    $region5: #{tpu_custom_call.1} parent=1 // pred_fallthru
      _
    // Predicated region
    $region6: #{tpu_custom_call.1} parent=1 // pred_check
      _
    $region7: #{tpu_custom_call.1} parent=1 // pred_check_branch
      %25 = sbr.rel (0) target = $region9
    $region8: #{tpu_custom_call.1} parent=1 // pred_region
      _
    $region9: #{tpu_custom_call.1} parent=1 // pred_fallthru
      _
    // Predicated region
    $region10: #{tpu_custom_call.1} parent=1 // pred_check
      _
    $region11: #{tpu_custom_call.1} parent=1 // pred_check_branch
      %27 = sbr.rel (0) target = $region13
    $region12: #{tpu_custom_call.1} parent=1 // pred_region
      _
    $region13: #{tpu_custom_call.1} parent=1 // pred_fallthru
      _
    // Predicated region
    $region14: #{tpu_custom_call.1} parent=1 // pred_check
      _
    $region15: #{tpu_custom_call.1} parent=1 // pred_check_branch
      %29 = sbr.rel (0) target = $region17
    $region16: #{tpu_custom_call.1} parent=1 // pred_region
      _
    $region17: #{tpu_custom_call.1} parent=1 // pred_fallthru
      _
    // Predicated region
    $region18: #{tpu_custom_call.1} parent=1 // pred_check
      _
    $region19: #{tpu_custom_call.1} parent=1 // pred_check_branch
      %31 = sbr.rel (0) target = $region21
    $region20: #{tpu_custom_call.1} parent=1 // pred_region
      _
    $region21: #{tpu_custom_call.1} parent=1 // pred_fallthru
      _
    // Predicated region
    $region22: #{tpu_custom_call.1} parent=1 // pred_check
      _
    $region23: #{tpu_custom_call.1} parent=1 // pred_check_branch
      %33 = sbr.rel (0) target = $region25
    $region24: #{tpu_custom_call.1} parent=1 // pred_region
      _
    $region25: #{tpu_custom_call.1} parent=1 // pred_fallthru
      _
    // Predicated region
    $region26: #{tpu_custom_call.1} parent=1 // pred_check
      _
    $region27: #{tpu_custom_call.1} parent=1 // pred_check_branch
      %35 = sbr.rel (0) target = $region29
    $region28: #{tpu_custom_call.1} parent=1 // pred_region
      _
    $region29: #{tpu_custom_call.1} parent=1 // pred_fallthru
      _
    // Predicated region
    $region30: #{tpu_custom_call.1} parent=1 // pred_check
      _
    $region31: #{tpu_custom_call.1} parent=1 // pred_check_branch
      %37 = sbr.rel (0) target = $region33
    $region32: #{tpu_custom_call.1} parent=1 // pred_region
      _
    $region33: #{tpu_custom_call.1} parent=1 // pred_fallthru
      _
    // Predicated region
    $region34: #{tpu_custom_call.1} parent=1 // pred_check
      _
    $region35: #{tpu_custom_call.1} parent=1 // pred_check_branch
      %39 = sbr.rel (0) target = $region37
    $region36: #{tpu_custom_call.1} parent=1 // pred_region
      _
    $region37: #{tpu_custom_call.1} parent=1 // pred_fallthru
      _
    // Predicated region
    $region38: #{tpu_custom_call.1} parent=1 // pred_check
      _
    $region39: #{tpu_custom_call.1} parent=1 // pred_check_branch
      %41 = sbr.rel (0) target = $region41
    $region40: #{tpu_custom_call.1} parent=1 // pred_region
      _
    $region41: #{tpu_custom_call.1} parent=1 // pred_fallthru
      _
    // Predicated region
    $region42: #{tpu_custom_call.1} parent=1 // pred_check
      _
    $region43: #{tpu_custom_call.1} parent=1 // pred_check_branch
      %43 = sbr.rel (0) target = $region45
    $region44: #{tpu_custom_call.1} parent=1 // pred_region
      _
    $region45: #{tpu_custom_call.1} parent=1 // pred_fallthru
      _
    // Predicated region
    $region46: #{tpu_custom_call.1} parent=1 // pred_check
      _
    $region47: #{tpu_custom_call.1} parent=1 // pred_check_branch
      %45 = sbr.rel (0) target = $region49
    $region48: #{tpu_custom_call.1} parent=1 // pred_region
      _
    $region49: #{tpu_custom_call.1} parent=1 // pred_fallthru
      _
    // Predicated region
    $region50: #{tpu_custom_call.1} parent=1 // pred_check
      _
    $region51: #{tpu_custom_call.1} parent=1 // pred_check_branch
      %47 = sbr.rel (0) target = $region53
    $region52: #{tpu_custom_call.1} parent=1 // pred_region
      _
    $region53: #{tpu_custom_call.1} parent=1 // pred_fallthru
      _
    // Predicated region
    $region54: #{tpu_custom_call.1} parent=1 // pred_check
      _
    $region55: #{tpu_custom_call.1} parent=1 // pred_check_branch
      %49 = sbr.rel (0) target = $region57
    $region56: #{tpu_custom_call.1} parent=1 // pred_region
      _
    $region57: #{tpu_custom_call.1} parent=1 // pred_fallthru
      _
    // Predicated region
    $region58: #{tpu_custom_call.1} parent=1 // pred_check
      _
    $region59: #{tpu_custom_call.1} parent=1 // pred_check_branch
      %51 = sbr.rel (0) target = $region61
    $region60: #{tpu_custom_call.1} parent=1 // pred_region
      _
    $region61: #{tpu_custom_call.1} parent=1 // pred_fallthru
      _
    // Predicated region
    $region62: #{tpu_custom_call.1} parent=1 // pred_check
      _
    $region63: #{tpu_custom_call.1} parent=1 // pred_check_branch
      %53 = sbr.rel (0) target = $region65
    $region64: #{tpu_custom_call.1} parent=1 // pred_region
      _
    $region65: #{tpu_custom_call.1} parent=1 // pred_fallthru
      _
    %v54 = vlaneseq
    %v55 = vand.u32 %v54, 127
    %v56 = vld [vmem:[%s0] sm:$0xff]
    %v57 = vlaneseq
    %v58 = vshrl.u32 %v57, 7
    %vm59 = vcmp.eq.s32.totalorder %v58, %v55
    %v60 = vsel %vm59, 1, 0
    %v61 = vcvt.s32.f32 %v60
    %v62 = vxor.u32 %v56, 2147483648
    %v63 = vmul.f32 %v62, 1.442695
    %v64 = vpow.pop %v63
    %v65 = vadd.f32 %v64, 1.0
    %v66 = vrcp.pop %v65
    %v67 = vmul.f32 1.0, %v66
    %v68 = vsub.f32 1.0, %v61
    %v69 = vmul.f32 %v67, %v68
    %vm70 = vcmask 64512
    %v72 = vsel %vm70, %v69, 0
    %74 = vmatprep.subr.mxu0 0.0
    %75 = vmatpush1.msra.mxu0 %v69
    %76 = vmatprep.subr.mxu0 0.0
    %77 = vmatpush1.msra.mxu0 0.0
    %78 = vmatprep.subr.mxu0 0.0
    %79 = vmatpush1.msra.mxu0 0.0
    %80 = vmatprep.subr.mxu0 0.0
    %81 = vmatpush1.msra.mxu0 0.0
    %82 = vmatprep.subr.mxu0 0.0
    %83 = vmatpush1.msra.mxu0 0.0
    %84 = vmatprep.subr.mxu0 0.0
    %85 = vmatpush1.msra.mxu0 0.0
    %86 = vmatprep.subr.mxu0 0.0
    %87 = vmatpush1.msra.mxu0 0.0
    %88 = vmatprep.subr.mxu0 0.0
    %89 = vmatpush1.msra.mxu0 0.0
    %90 = vmatprep.subr.mxu0 0.0
    %91 = vmatpush1.msra.mxu0 0.0
    %92 = vmatprep.subr.mxu0 0.0
    %93 = vmatpush1.msra.mxu0 0.0
    %94 = vmatprep.subr.mxu0 0.0
    %95 = vmatpush1.msra.mxu0 0.0
    %96 = vmatprep.subr.mxu0 0.0
    %97 = vmatpush1.msra.mxu0 0.0
    %98 = vmatprep.subr.mxu0 0.0
    %99 = vmatpush1.msra.mxu0 0.0
    %100 = vmatprep.subr.mxu0 0.0
    %101 = vmatpush1.msra.mxu0 0.0
    %102 = vmatprep.subr.mxu0 0.0
    %103 = vmatpush1.msra.mxu0 0.0
    %104 = vmatprep.subr.mxu0 0.0
    %105 = vmatpush1.msra.mxu0 0.0
    %106 = vmatprep.subr.mxu0 0.0
    %107 = vmatpush1.msra.mxu0 0.0
    %108 = vmatprep.subr.mxu0 0.0
    %109 = vmatpush1.msra.mxu0 0.0
    %110 = vmatprep.subr.mxu0 0.0
    %111 = vmatpush1.msra.mxu0 0.0
    %112 = vmatprep.subr.mxu0 0.0
    %113 = vmatpush1.msra.mxu0 0.0
    %114 = vmatprep.subr.mxu0 0.0
    %115 = vmatpush1.msra.mxu0 0.0
    %116 = vmatprep.subr.mxu0 0.0
    %117 = vmatpush1.msra.mxu0 0.0
    %118 = vmatprep.subr.mxu0 0.0
    %119 = vmatpush1.msra.mxu0 0.0
    %120 = vmatprep.subr.mxu0 0.0
    %121 = vmatpush1.msra.mxu0 0.0
    %122 = vmatprep.subr.mxu0 0.0
    %123 = vmatpush1.msra.mxu0 0.0
    %124 = vmatprep.subr.mxu0 0.0
    %125 = vmatpush1.msra.mxu0 0.0
    %126 = vmatprep.subr.mxu0 0.0
    %127 = vmatpush1.msra.mxu0 0.0
    %128 = vmatprep.subr.mxu0 0.0
    %129 = vmatpush1.msra.mxu0 0.0
    %130 = vmatprep.subr.mxu0 0.0
    %131 = vmatpush1.msra.mxu0 0.0
    %132 = vmatprep.subr.mxu0 0.0
    %133 = vmatpush1.msra.mxu0 0.0
    %134 = vmatprep.subr.mxu0 0.0
    %135 = vmatpush1.msra.mxu0 0.0
    %136 = vmatprep.subr.mxu0 0.0
    %137 = vmatpush1.msra.mxu0 0.0
    %138 = vmatprep.mubr.f32.mxu0 0.0
    %139 = vmatmul.mubr.f32.gmra.mrb[0].mxu0 %v72
    %v140 = vpop.f32.mrb[0].mxu0
    %v141 = vadd.f32 0.0, %v140
    %v142 = vpop.f32.mrb[0].mxu0
    %143 = vdwg.mxu0
    %v144 = vsub.f32 1.0, %v69
    %v145 = vmul.f32 %v141, %v144
    %v146 = vsel %vm70, %v145, 0.0
    %147 = vadd.xlane.f32.xlu0 %v146
    %v148 = vpop.xlane.xlu0 %147
    %v149 = vrot.slane %v148, 4
    %v150 = vadd.f32 %v148, %v149
    %v151 = vrot.slane %v150, 2
    %v152 = vadd.f32 %v150, %v151
    %v153 = vrot.slane %v152, 1
    %v154 = vadd.f32 %v152, %v153
    %s155 = vtos %v154
    %v156 = vld [vmem:[%s4] sm:$0xff]
    %v157 = vld [vmem:[%s5] sm:$0xff]
    %v158 = vld [vmem:[%s11] sm:$0xff]
    %v159 = vld [vmem:[%s12] sm:$0x1]
    %v160 = vld [vmem:[%s13] sm:$0x1]
    %v162 = vsel %vm70, %v156, 0
    %v165 = vsel %vm70, %v157, 0
    %167 = vmatprep.subr.mxu0 0.0
    %168 = vmatpush1.msra.mxu0 %v158
    %169 = vmatprep.subr.mxu0 0.0
    %170 = vmatpush1.msra.mxu0 0.0
    %171 = vmatprep.subr.mxu0 0.0
    %172 = vmatpush1.msra.mxu0 0.0
    %173 = vmatprep.subr.mxu0 0.0
    %174 = vmatpush1.msra.mxu0 0.0
    %175 = vmatprep.subr.mxu0 0.0
    %176 = vmatpush1.msra.mxu0 0.0
    %177 = vmatprep.subr.mxu0 0.0
    %178 = vmatpush1.msra.mxu0 0.0
    %179 = vmatprep.subr.mxu0 0.0
    %180 = vmatpush1.msra.mxu0 0.0
    %181 = vmatprep.subr.mxu0 0.0
    %182 = vmatpush1.msra.mxu0 0.0
    %183 = vmatprep.subr.mxu0 0.0
    %184 = vmatpush1.msra.mxu0 0.0
    %185 = vmatprep.subr.mxu0 0.0
    %186 = vmatpush1.msra.mxu0 0.0
    %187 = vmatprep.subr.mxu0 0.0
    %188 = vmatpush1.msra.mxu0 0.0
    %189 = vmatprep.subr.mxu0 0.0
    %190 = vmatpush1.msra.mxu0 0.0
    %191 = vmatprep.subr.mxu0 0.0
    %192 = vmatpush1.msra.mxu0 0.0
    %193 = vmatprep.subr.mxu0 0.0
    %194 = vmatpush1.msra.mxu0 0.0
    %195 = vmatprep.subr.mxu0 0.0
    %196 = vmatpush1.msra.mxu0 0.0
    %197 = vmatprep.subr.mxu0 0.0
    %198 = vmatpush1.msra.mxu0 0.0
    %199 = vmatprep.subr.mxu0 0.0
    %200 = vmatpush1.msra.mxu0 0.0
    %201 = vmatprep.subr.mxu0 0.0
    %202 = vmatpush1.msra.mxu0 0.0
    %203 = vmatprep.subr.mxu0 0.0
    %204 = vmatpush1.msra.mxu0 0.0
    %205 = vmatprep.subr.mxu0 0.0
    %206 = vmatpush1.msra.mxu0 0.0
    %207 = vmatprep.subr.mxu0 0.0
    %208 = vmatpush1.msra.mxu0 0.0
    %209 = vmatprep.subr.mxu0 0.0
    %210 = vmatpush1.msra.mxu0 0.0
    %211 = vmatprep.subr.mxu0 0.0
    %212 = vmatpush1.msra.mxu0 0.0
    %213 = vmatprep.subr.mxu0 0.0
    %214 = vmatpush1.msra.mxu0 0.0
    %215 = vmatprep.subr.mxu0 0.0
    %216 = vmatpush1.msra.mxu0 0.0
    %217 = vmatprep.subr.mxu0 0.0
    %218 = vmatpush1.msra.mxu0 0.0
    %219 = vmatprep.subr.mxu0 0.0
    %220 = vmatpush1.msra.mxu0 0.0
    %221 = vmatprep.subr.mxu0 0.0
    %222 = vmatpush1.msra.mxu0 0.0
    %223 = vmatprep.subr.mxu0 0.0
    %224 = vmatpush1.msra.mxu0 0.0
    %225 = vmatprep.subr.mxu0 0.0
    %226 = vmatpush1.msra.mxu0 0.0
    %227 = vmatprep.subr.mxu0 0.0
    %228 = vmatpush1.msra.mxu0 0.0
    %229 = vmatprep.subr.mxu0 0.0
    %230 = vmatpush1.msra.mxu0 0.0
    %231 = vmatprep.mubr.f32.mxu0 0.0
    %232 = vmatmul.mubr.f32.gmra.mrb[0].mxu0 %v162
    %v233 = vpop.f32.mrb[0].mxu0
    %v234 = vadd.f32 0.0, %v233
    %v235 = vpop.f32.mrb[0].mxu0
    %236 = vmatprep.mubr.f32.mxu0 0.0
    %237 = vmatmul.mubr.f32.gmra.mrb[0].mxu0 %v165
    %v238 = vpop.f32.mrb[0].mxu0
    %v239 = vadd.f32 0.0, %v238
    %v240 = vpop.f32.mrb[0].mxu0
    %241 = vdwg.mxu0
    %vm242 = vcmask 261120
    %v243 = vsel %vm242, %v234, 0.0
    %v244 = vrot.slane %v243, 4
    %v245 = vadd.f32 %v243, %v244
    %v246 = vrot.slane %v245, 2
    %v247 = vadd.f32 %v245, %v246
    %v248 = vrot.slane %v247, 1
    %v249 = vadd.f32 %v247, %v248
    %v250 = vmul.f32 %v249, 0.125
    %v251 = vsub.f32 %v234, %v250
    %v252 = vmul.f32 %v251, %v251
    %v253 = vsel %vm242, %v252, 0.0
    %v254 = vrot.slane %v253, 4
    %v255 = vadd.f32 %v253, %v254
    %v256 = vrot.slane %v255, 2
    %v257 = vadd.f32 %v255, %v256
    %v258 = vrot.slane %v257, 1
    %v259 = vadd.f32 %v257, %v258
    %v260 = vmul.f32 %v259, 0.125
    %v261 = vadd.f32 %v260, 1e-05
    %v262 = vrsqrt.pop %v261
    %v263 = vmul.f32 %v251, %v262
    %v265 = vlaneseq
    %v266 = vshrl.u32 %v265, 7
    %v267 = vsub.s32 0, %v266
    %v268 = vrot.slane %v159, %v267
    %v270 = vmul.f32 %v263, %v268
    %v272 = vlaneseq
    %v273 = vshrl.u32 %v272, 7
    %v274 = vsub.s32 0, %v273
    %v275 = vrot.slane %v160, %v274
    %v277 = vadd.f32 %v270, %v275
    %vm278 = vcmp.ge.f32.partialorder %v277, 0.0
    %v279 = vmul.f32 %v277, 0.01
    %v280 = vsel %vm278, %v277, %v279
    %v281 = vsel %vm242, %v239, 0.0
    %v282 = vrot.slane %v281, 4
    %v283 = vadd.f32 %v281, %v282
    %v284 = vrot.slane %v283, 2
    %v285 = vadd.f32 %v283, %v284
    %v286 = vrot.slane %v285, 1
    %v287 = vadd.f32 %v285, %v286
    %v288 = vmul.f32 %v287, 0.125
    %v289 = vsub.f32 %v239, %v288
    %v290 = vmul.f32 %v289, %v289
    %v291 = vsel %vm242, %v290, 0.0
    %v292 = vrot.slane %v291, 4
    %v293 = vadd.f32 %v291, %v292
    %v294 = vrot.slane %v293, 2
    %v295 = vadd.f32 %v293, %v294
    %v296 = vrot.slane %v295, 1
    %v297 = vadd.f32 %v295, %v296
    %v298 = vmul.f32 %v297, 0.125
    %v299 = vadd.f32 %v298, 1e-05
    %v300 = vrsqrt.pop %v299
    %v301 = vmul.f32 %v289, %v300
    %v302 = vmul.f32 %v301, %v268
    %v303 = vadd.f32 %v302, %v275
    %vm304 = vcmp.ge.f32.partialorder %v303, 0.0
    %v305 = vmul.f32 %v303, 0.01
    %v306 = vsel %vm304, %v303, %v305
    %v307 = vld [vmem:[%s14] sm:$0xff]
    %v308 = vld [vmem:[%s14 + $0x8] sm:$0xff]
    %v309 = vld [vmem:[%s14 + $0x10] sm:$0xff]
    %v310 = vld [vmem:[%s14 + $0x18] sm:$0xff]
    %v311 = vld [vmem:[%s15] sm:$0x1]
    %v313 = vlaneseq
    %v314 = vshrl.u32 %v313, 7
    %v315 = vsub.s32 0, %v314
    %v316 = vrot.slane %v311, %v315
    %v319 = vsel %vm242, %v280, 0
    %v322 = vsel %vm242, %v306, 0
    %324 = vmatprep.subr.mxu0 0.0
    %325 = vmatpush1.msra.mxu0 %v307
    %326 = vmatprep.subr.mxu0 0.0
    %327 = vmatpush1.msra.mxu0 %v308
    %328 = vmatprep.subr.mxu0 0.0
    %329 = vmatpush1.msra.mxu0 %v309
    %330 = vmatprep.subr.mxu0 0.0
    %331 = vmatpush1.msra.mxu0 %v310
    %332 = vmatprep.subr.mxu0 0.0
    %333 = vmatpush1.msra.mxu0 0.0
    %334 = vmatprep.subr.mxu0 0.0
    %335 = vmatpush1.msra.mxu0 0.0
    %336 = vmatprep.subr.mxu0 0.0
    %337 = vmatpush1.msra.mxu0 0.0
    %338 = vmatprep.subr.mxu0 0.0
    %339 = vmatpush1.msra.mxu0 0.0
    %340 = vmatprep.subr.mxu0 0.0
    %341 = vmatpush1.msra.mxu0 0.0
    %342 = vmatprep.subr.mxu0 0.0
    %343 = vmatpush1.msra.mxu0 0.0
    %344 = vmatprep.subr.mxu0 0.0
    %345 = vmatpush1.msra.mxu0 0.0
    %346 = vmatprep.subr.mxu0 0.0
    %347 = vmatpush1.msra.mxu0 0.0
    %348 = vmatprep.subr.mxu0 0.0
    %349 = vmatpush1.msra.mxu0 0.0
    %350 = vmatprep.subr.mxu0 0.0
    %351 = vmatpush1.msra.mxu0 0.0
    %352 = vmatprep.subr.mxu0 0.0
    %353 = vmatpush1.msra.mxu0 0.0
    %354 = vmatprep.subr.mxu0 0.0
    %355 = vmatpush1.msra.mxu0 0.0
    %356 = vmatprep.subr.mxu0 0.0
    %357 = vmatpush1.msra.mxu0 0.0
    %358 = vmatprep.subr.mxu0 0.0
    %359 = vmatpush1.msra.mxu0 0.0
    %360 = vmatprep.subr.mxu0 0.0
    %361 = vmatpush1.msra.mxu0 0.0
    %362 = vmatprep.subr.mxu0 0.0
    %363 = vmatpush1.msra.mxu0 0.0
    %364 = vmatprep.subr.mxu0 0.0
    %365 = vmatpush1.msra.mxu0 0.0
    %366 = vmatprep.subr.mxu0 0.0
    %367 = vmatpush1.msra.mxu0 0.0
    %368 = vmatprep.subr.mxu0 0.0
    %369 = vmatpush1.msra.mxu0 0.0
    %370 = vmatprep.subr.mxu0 0.0
    %371 = vmatpush1.msra.mxu0 0.0
    %372 = vmatprep.subr.mxu0 0.0
    %373 = vmatpush1.msra.mxu0 0.0
    %374 = vmatprep.subr.mxu0 0.0
    %375 = vmatpush1.msra.mxu0 0.0
    %376 = vmatprep.subr.mxu0 0.0
    %377 = vmatpush1.msra.mxu0 0.0
    %378 = vmatprep.subr.mxu0 0.0
    %379 = vmatpush1.msra.mxu0 0.0
    %380 = vmatprep.subr.mxu0 0.0
    %381 = vmatpush1.msra.mxu0 0.0
    %382 = vmatprep.subr.mxu0 0.0
    %383 = vmatpush1.msra.mxu0 0.0
    %384 = vmatprep.subr.mxu0 0.0
    %385 = vmatpush1.msra.mxu0 0.0
    %386 = vmatprep.subr.mxu0 0.0
    %387 = vmatpush1.msra.mxu0 0.0
    %388 = vmatprep.mubr.f32.mxu0 0.0
    %389 = vmatmul.mubr.f32.gmra.mrb[0].mxu0 %v319
    %v390 = vpop.f32.mrb[0].mxu0
    %v391 = vadd.f32 %v316, %v390
    %v392 = vpop.f32.mrb[0].mxu0
    %393 = vmatprep.mubr.f32.mxu0 0.0
    %394 = vmatmul.mubr.f32.gmra.mrb[0].mxu0 %v322
    %v395 = vpop.f32.mrb[0].mxu0
    %v396 = vadd.f32 %v316, %v395
    %v397 = vpop.f32.mrb[0].mxu0
    %398 = vdwg.mxu0
    %v399 = vld [vmem:[%s1] sm:$0xff]
    %v400 = vld [vmem:[%s1 + $0x8] sm:$0xff]
    %v401 = vld [vmem:[%s1 + $0x10] sm:$0xff]
    %v402 = vld [vmem:[%s1 + $0x18] sm:$0xff]
    %v403 = vld [vmem:[%s1 + $0x20] sm:$0xff]
    %v404 = vld [vmem:[%s1 + $0x28] sm:$0xff]
    %v405 = vld [vmem:[%s1 + $0x30] sm:$0xff]
    %v406 = vld [vmem:[%s1 + $0x38] sm:$0xff]
    %v407 = vld [vmem:[%s6] sm:$0xff]
    %v408 = vld [vmem:[%s6 + $0x8] sm:$0xff]
    %v409 = vld [vmem:[%s7] sm:$0x1]
    %v410 = vld [vmem:[%s8] sm:$0x1]
    %vm411 = vcmask 130048
    %v413 = vsel %vm411, %v399, 0
    %v416 = vsel %vm411, %v400, 0
    %v419 = vsel %vm411, %v401, 0
    %v422 = vsel %vm411, %v402, 0
    %v425 = vsel %vm411, %v403, 0
    %v428 = vsel %vm411, %v404, 0
    %v431 = vsel %vm411, %v405, 0
    %v434 = vsel %vm411, %v406, 0
    %v437 = vsel %vm411, %v396, 0
    %439 = vmatprep.subr.mxu0 0.0
    %440 = vmatpush1.msra.mxu0 %v407
    %441 = vmatprep.subr.mxu0 0.0
    %442 = vmatpush1.msra.mxu0 %v408
    %443 = vmatprep.subr.mxu0 0.0
    %444 = vmatpush1.msra.mxu0 0.0
    %445 = vmatprep.subr.mxu0 0.0
    %446 = vmatpush1.msra.mxu0 0.0
    %447 = vmatprep.subr.mxu0 0.0
    %448 = vmatpush1.msra.mxu0 0.0
    %449 = vmatprep.subr.mxu0 0.0
    %450 = vmatpush1.msra.mxu0 0.0
    %451 = vmatprep.subr.mxu0 0.0
    %452 = vmatpush1.msra.mxu0 0.0
    %453 = vmatprep.subr.mxu0 0.0
    %454 = vmatpush1.msra.mxu0 0.0
    %455 = vmatprep.subr.mxu0 0.0
    %456 = vmatpush1.msra.mxu0 0.0
    %457 = vmatprep.subr.mxu0 0.0
    %458 = vmatpush1.msra.mxu0 0.0
    %459 = vmatprep.subr.mxu0 0.0
    %460 = vmatpush1.msra.mxu0 0.0
    %461 = vmatprep.subr.mxu0 0.0
    %462 = vmatpush1.msra.mxu0 0.0
    %463 = vmatprep.subr.mxu0 0.0
    %464 = vmatpush1.msra.mxu0 0.0
    %465 = vmatprep.subr.mxu0 0.0
    %466 = vmatpush1.msra.mxu0 0.0
    %467 = vmatprep.subr.mxu0 0.0
    %468 = vmatpush1.msra.mxu0 0.0
    %469 = vmatprep.subr.mxu0 0.0
    %470 = vmatpush1.msra.mxu0 0.0
    %471 = vmatprep.subr.mxu0 0.0
    %472 = vmatpush1.msra.mxu0 0.0
    %473 = vmatprep.subr.mxu0 0.0
    %474 = vmatpush1.msra.mxu0 0.0
    %475 = vmatprep.subr.mxu0 0.0
    %476 = vmatpush1.msra.mxu0 0.0
    %477 = vmatprep.subr.mxu0 0.0
    %478 = vmatpush1.msra.mxu0 0.0
    %479 = vmatprep.subr.mxu0 0.0
    %480 = vmatpush1.msra.mxu0 0.0
    %481 = vmatprep.subr.mxu0 0.0
    %482 = vmatpush1.msra.mxu0 0.0
    %483 = vmatprep.subr.mxu0 0.0
    %484 = vmatpush1.msra.mxu0 0.0
    %485 = vmatprep.subr.mxu0 0.0
    %486 = vmatpush1.msra.mxu0 0.0
    %487 = vmatprep.subr.mxu0 0.0
    %488 = vmatpush1.msra.mxu0 0.0
    %489 = vmatprep.subr.mxu0 0.0
    %490 = vmatpush1.msra.mxu0 0.0
    %491 = vmatprep.subr.mxu0 0.0
    %492 = vmatpush1.msra.mxu0 0.0
    %493 = vmatprep.subr.mxu0 0.0
    %494 = vmatpush1.msra.mxu0 0.0
    %495 = vmatprep.subr.mxu0 0.0
    %496 = vmatpush1.msra.mxu0 0.0
    %497 = vmatprep.subr.mxu0 0.0
    %498 = vmatpush1.msra.mxu0 0.0
    %499 = vmatprep.subr.mxu0 0.0
    %500 = vmatpush1.msra.mxu0 0.0
    %501 = vmatprep.subr.mxu0 0.0
    %502 = vmatpush1.msra.mxu0 0.0
    %503 = vmatprep.mubr.f32.mxu0 0.0
    %504 = vmatmul.mubr.f32.gmra.mrb[0].mxu0 %v413
    %v505 = vpop.f32.mrb[0].mxu0
    %v506 = vadd.f32 0.0, %v505
    %v507 = vpop.f32.mrb[0].mxu0
    %508 = vmatprep.mubr.f32.mxu0 0.0
    %509 = vmatmul.mubr.f32.gmra.mrb[0].mxu0 %v416
    %v510 = vpop.f32.mrb[0].mxu0
    %v511 = vadd.f32 0.0, %v510
    %v512 = vpop.f32.mrb[0].mxu0
    %513 = vmatprep.mubr.f32.mxu0 0.0
    %514 = vmatmul.mubr.f32.gmra.mrb[0].mxu0 %v419
    %v515 = vpop.f32.mrb[0].mxu0
    %v516 = vadd.f32 0.0, %v515
    %v517 = vpop.f32.mrb[0].mxu0
    %518 = vmatprep.mubr.f32.mxu0 0.0
    %519 = vmatmul.mubr.f32.gmra.mrb[0].mxu0 %v422
    %v520 = vpop.f32.mrb[0].mxu0
    %v521 = vadd.f32 0.0, %v520
    %v522 = vpop.f32.mrb[0].mxu0
    %523 = vmatprep.mubr.f32.mxu0 0.0
    %524 = vmatmul.mubr.f32.gmra.mrb[0].mxu0 %v425
    %v525 = vpop.f32.mrb[0].mxu0
    %v526 = vadd.f32 0.0, %v525
    %v527 = vpop.f32.mrb[0].mxu0
    %528 = vmatprep.mubr.f32.mxu0 0.0
    %529 = vmatmul.mubr.f32.gmra.mrb[0].mxu0 %v428
    %v530 = vpop.f32.mrb[0].mxu0
    %v531 = vadd.f32 0.0, %v530
    %v532 = vpop.f32.mrb[0].mxu0
    %533 = vmatprep.mubr.f32.mxu0 0.0
    %534 = vmatmul.mubr.f32.gmra.mrb[0].mxu0 %v431
    %v535 = vpop.f32.mrb[0].mxu0
    %v536 = vadd.f32 0.0, %v535
    %v537 = vpop.f32.mrb[0].mxu0
    %538 = vmatprep.mubr.f32.mxu0 0.0
    %539 = vmatmul.mubr.f32.gmra.mrb[0].mxu0 %v434
    %v540 = vpop.f32.mrb[0].mxu0
    %v541 = vadd.f32 0.0, %v540
    %v542 = vpop.f32.mrb[0].mxu0
    %543 = vmatprep.mubr.f32.mxu0 0.0
    %544 = vmatmul.mubr.f32.gmra.mrb[0].mxu0 %v437
    %v545 = vpop.f32.mrb[0].mxu0
    %v546 = vadd.f32 0.0, %v545
    %v547 = vpop.f32.mrb[0].mxu0
    %548 = vdwg.mxu0
    %v549 = vsel %vm242, %v506, 0.0
    %v550 = vsel %vm242, %v511, 0.0
    %v551 = vadd.f32 %v549, %v550
    %v552 = vsel %vm242, %v516, 0.0
    %v553 = vadd.f32 %v551, %v552
    %v554 = vsel %vm242, %v521, 0.0
    %v555 = vadd.f32 %v553, %v554
    %v556 = vsel %vm242, %v526, 0.0
    %v557 = vadd.f32 %v555, %v556
    %v558 = vsel %vm242, %v531, 0.0
    %v559 = vadd.f32 %v557, %v558
    %v560 = vsel %vm242, %v536, 0.0
    %v561 = vadd.f32 %v559, %v560
    %v562 = vsel %vm242, %v541, 0.0
    %v563 = vadd.f32 %v561, %v562
    %v564 = vrot.slane %v563, 4
    %v565 = vadd.f32 %v563, %v564
    %v566 = vrot.slane %v565, 2
    %v567 = vadd.f32 %v565, %v566
    %v568 = vrot.slane %v567, 1
    %v569 = vadd.f32 %v567, %v568
    %v570 = vmul.f32 %v569, 0.015625
    %v571 = vsub.f32 %v506, %v570
    %v572 = vsub.f32 %v511, %v570
    %v573 = vsub.f32 %v516, %v570
    %v574 = vsub.f32 %v521, %v570
    %v575 = vsub.f32 %v526, %v570
    %v576 = vsub.f32 %v531, %v570
    %v577 = vsub.f32 %v536, %v570
    %v578 = vsub.f32 %v541, %v570
    %v579 = vmul.f32 %v571, %v571
    %v580 = vmul.f32 %v572, %v572
    %v581 = vmul.f32 %v573, %v573
    %v582 = vmul.f32 %v574, %v574
    %v583 = vmul.f32 %v575, %v575
    %v584 = vmul.f32 %v576, %v576
    %v585 = vmul.f32 %v577, %v577
    %v586 = vmul.f32 %v578, %v578
    %v587 = vsel %vm242, %v579, 0.0
    %v588 = vsel %vm242, %v580, 0.0
    %v589 = vadd.f32 %v587, %v588
    %v590 = vsel %vm242, %v581, 0.0
    %v591 = vadd.f32 %v589, %v590
    %v592 = vsel %vm242, %v582, 0.0
    %v593 = vadd.f32 %v591, %v592
    %v594 = vsel %vm242, %v583, 0.0
    %v595 = vadd.f32 %v593, %v594
    %v596 = vsel %vm242, %v584, 0.0
    %v597 = vadd.f32 %v595, %v596
    %v598 = vsel %vm242, %v585, 0.0
    %v599 = vadd.f32 %v597, %v598
    %v600 = vsel %vm242, %v586, 0.0
    %v601 = vadd.f32 %v599, %v600
    %v602 = vrot.slane %v601, 4
    %v603 = vadd.f32 %v601, %v602
    %v604 = vrot.slane %v603, 2
    %v605 = vadd.f32 %v603, %v604
    %v606 = vrot.slane %v605, 1
    %v607 = vadd.f32 %v605, %v606
    %v608 = vmul.f32 %v607, 0.015625
    %v609 = vadd.f32 %v608, 1e-05
    %v610 = vrsqrt.pop %v609
    %v611 = vmul.f32 %v571, %v610
    %v612 = vmul.f32 %v572, %v610
    %v613 = vmul.f32 %v573, %v610
    %v614 = vmul.f32 %v574, %v610
    %v615 = vmul.f32 %v575, %v610
    %v616 = vmul.f32 %v576, %v610
    %v617 = vmul.f32 %v577, %v610
    %v618 = vmul.f32 %v578, %v610
    %v620 = vlaneseq
    %v621 = vshrl.u32 %v620, 7
    %v622 = vsub.s32 0, %v621
    %v623 = vrot.slane %v409, %v622
    %v625 = vmul.f32 %v611, %v623
    %v626 = vmul.f32 %v612, %v623
    %v627 = vmul.f32 %v613, %v623
    %v628 = vmul.f32 %v614, %v623
    %v629 = vmul.f32 %v615, %v623
    %v630 = vmul.f32 %v616, %v623
    %v631 = vmul.f32 %v617, %v623
    %v632 = vmul.f32 %v618, %v623
    %v634 = vlaneseq
    %v635 = vshrl.u32 %v634, 7
    %v636 = vsub.s32 0, %v635
    %v637 = vrot.slane %v410, %v636
    %v639 = vadd.f32 %v625, %v637
    %v640 = vadd.f32 %v626, %v637
    %v641 = vadd.f32 %v627, %v637
    %v642 = vadd.f32 %v628, %v637
    %v643 = vadd.f32 %v629, %v637
    %v644 = vadd.f32 %v630, %v637
    %v645 = vadd.f32 %v631, %v637
    %v646 = vadd.f32 %v632, %v637
    %vm647 = vcmp.ge.f32.partialorder %v639, 0.0
    %vm648 = vcmp.ge.f32.partialorder %v640, 0.0
    %vm649 = vcmp.ge.f32.partialorder %v641, 0.0
    %vm650 = vcmp.ge.f32.partialorder %v642, 0.0
    %vm651 = vcmp.ge.f32.partialorder %v643, 0.0
    %vm652 = vcmp.ge.f32.partialorder %v644, 0.0
    %vm653 = vcmp.ge.f32.partialorder %v645, 0.0
    %vm654 = vcmp.ge.f32.partialorder %v646, 0.0
    %v655 = vmul.f32 %v639, 0.01
    %v656 = vmul.f32 %v640, 0.01
    %v657 = vmul.f32 %v641, 0.01
    %v658 = vmul.f32 %v642, 0.01
    %v659 = vmul.f32 %v643, 0.01
    %v660 = vmul.f32 %v644, 0.01
    %v661 = vmul.f32 %v645, 0.01
    %v662 = vmul.f32 %v646, 0.01
    %v663 = vsel %vm647, %v639, %v655
    %v664 = vsel %vm648, %v640, %v656
    %v665 = vsel %vm649, %v641, %v657
    %v666 = vsel %vm650, %v642, %v658
    %v667 = vsel %vm651, %v643, %v659
    %v668 = vsel %vm652, %v644, %v660
    %v669 = vsel %vm653, %v645, %v661
    %v670 = vsel %vm654, %v646, %v662
    %v671 = vsel %vm242, %v546, 0.0
    %v672 = vrot.slane %v671, 4
    %v673 = vadd.f32 %v671, %v672
    %v674 = vrot.slane %v673, 2
    %v675 = vadd.f32 %v673, %v674
    %v676 = vrot.slane %v675, 1
    %v677 = vadd.f32 %v675, %v676
    %v678 = vmul.f32 %v677, 0.125
    %v679 = vsub.f32 %v546, %v678
    %v680 = vmul.f32 %v679, %v679
    %v681 = vsel %vm242, %v680, 0.0
    %v682 = vrot.slane %v681, 4
    %v683 = vadd.f32 %v681, %v682
    %v684 = vrot.slane %v683, 2
    %v685 = vadd.f32 %v683, %v684
    %v686 = vrot.slane %v685, 1
    %v687 = vadd.f32 %v685, %v686
    %v688 = vmul.f32 %v687, 0.125
    %v689 = vadd.f32 %v688, 1e-05
    %v690 = vrsqrt.pop %v689
    %v691 = vmul.f32 %v679, %v690
    %v692 = vmul.f32 %v691, %v623
    %v693 = vadd.f32 %v692, %v637
    %vm694 = vcmp.ge.f32.partialorder %v693, 0.0
    %v695 = vmul.f32 %v693, 0.01
    %v696 = vsel %vm694, %v693, %v695
    %v697 = vld [vmem:[%s9] sm:$0xff]
    %v698 = vld [vmem:[%s9 + $0x8] sm:$0xff]
    %v699 = vld [vmem:[%s9 + $0x10] sm:$0xff]
    %v700 = vld [vmem:[%s9 + $0x18] sm:$0xff]
    %v701 = vld [vmem:[%s10] sm:$0x1]
    %v703 = vlaneseq
    %v704 = vshrl.u32 %v703, 7
    %v705 = vsub.s32 0, %v704
    %v706 = vrot.slane %v701, %v705
    %v709 = vsel %vm242, %v663, 0
    %v712 = vsel %vm242, %v664, 0
    %v715 = vsel %vm242, %v665, 0
    %v718 = vsel %vm242, %v666, 0
    %v721 = vsel %vm242, %v667, 0
    %v724 = vsel %vm242, %v668, 0
    %v727 = vsel %vm242, %v669, 0
    %v730 = vsel %vm242, %v670, 0
    %v733 = vsel %vm242, %v696, 0
    %735 = vmatprep.subr.mxu0 0.0
    %736 = vmatpush1.msra.mxu0 %v697
    %737 = vmatprep.subr.mxu0 0.0
    %738 = vmatpush1.msra.mxu0 %v698
    %739 = vmatprep.subr.mxu0 0.0
    %740 = vmatpush1.msra.mxu0 %v699
    %741 = vmatprep.subr.mxu0 0.0
    %742 = vmatpush1.msra.mxu0 %v700
    %743 = vmatprep.subr.mxu0 0.0
    %744 = vmatpush1.msra.mxu0 0.0
    %745 = vmatprep.subr.mxu0 0.0
    %746 = vmatpush1.msra.mxu0 0.0
    %747 = vmatprep.subr.mxu0 0.0
    %748 = vmatpush1.msra.mxu0 0.0
    %749 = vmatprep.subr.mxu0 0.0
    %750 = vmatpush1.msra.mxu0 0.0
    %751 = vmatprep.subr.mxu0 0.0
    %752 = vmatpush1.msra.mxu0 0.0
    %753 = vmatprep.subr.mxu0 0.0
    %754 = vmatpush1.msra.mxu0 0.0
    %755 = vmatprep.subr.mxu0 0.0
    %756 = vmatpush1.msra.mxu0 0.0
    %757 = vmatprep.subr.mxu0 0.0
    %758 = vmatpush1.msra.mxu0 0.0
    %759 = vmatprep.subr.mxu0 0.0
    %760 = vmatpush1.msra.mxu0 0.0
    %761 = vmatprep.subr.mxu0 0.0
    %762 = vmatpush1.msra.mxu0 0.0
    %763 = vmatprep.subr.mxu0 0.0
    %764 = vmatpush1.msra.mxu0 0.0
    %765 = vmatprep.subr.mxu0 0.0
    %766 = vmatpush1.msra.mxu0 0.0
    %767 = vmatprep.subr.mxu0 0.0
    %768 = vmatpush1.msra.mxu0 0.0
    %769 = vmatprep.subr.mxu0 0.0
    %770 = vmatpush1.msra.mxu0 0.0
    %771 = vmatprep.subr.mxu0 0.0
    %772 = vmatpush1.msra.mxu0 0.0
    %773 = vmatprep.subr.mxu0 0.0
    %774 = vmatpush1.msra.mxu0 0.0
    %775 = vmatprep.subr.mxu0 0.0
    %776 = vmatpush1.msra.mxu0 0.0
    %777 = vmatprep.subr.mxu0 0.0
    %778 = vmatpush1.msra.mxu0 0.0
    %779 = vmatprep.subr.mxu0 0.0
    %780 = vmatpush1.msra.mxu0 0.0
    %781 = vmatprep.subr.mxu0 0.0
    %782 = vmatpush1.msra.mxu0 0.0
    %783 = vmatprep.subr.mxu0 0.0
    %784 = vmatpush1.msra.mxu0 0.0
    %785 = vmatprep.subr.mxu0 0.0
    %786 = vmatpush1.msra.mxu0 0.0
    %787 = vmatprep.subr.mxu0 0.0
    %788 = vmatpush1.msra.mxu0 0.0
    %789 = vmatprep.subr.mxu0 0.0
    %790 = vmatpush1.msra.mxu0 0.0
    %791 = vmatprep.subr.mxu0 0.0
    %792 = vmatpush1.msra.mxu0 0.0
    %793 = vmatprep.subr.mxu0 0.0
    %794 = vmatpush1.msra.mxu0 0.0
    %795 = vmatprep.subr.mxu0 0.0
    %796 = vmatpush1.msra.mxu0 0.0
    %797 = vmatprep.subr.mxu0 0.0
    %798 = vmatpush1.msra.mxu0 0.0
    %799 = vmatprep.mubr.f32.mxu0 0.0
    %800 = vmatmul.mubr.f32.gmra.mrb[0].mxu0 %v709
    %v801 = vpop.f32.mrb[0].mxu0
    %v802 = vadd.f32 %v706, %v801
    %v803 = vpop.f32.mrb[0].mxu0
    %804 = vmatprep.mubr.f32.mxu0 0.0
    %805 = vmatmul.mubr.f32.gmra.mrb[0].mxu0 %v712
    %v806 = vpop.f32.mrb[0].mxu0
    %v807 = vadd.f32 %v706, %v806
    %v808 = vpop.f32.mrb[0].mxu0
    %809 = vmatprep.mubr.f32.mxu0 0.0
    %810 = vmatmul.mubr.f32.gmra.mrb[0].mxu0 %v715
    %v811 = vpop.f32.mrb[0].mxu0
    %v812 = vadd.f32 %v706, %v811
    %v813 = vpop.f32.mrb[0].mxu0
    %814 = vmatprep.mubr.f32.mxu0 0.0
    %815 = vmatmul.mubr.f32.gmra.mrb[0].mxu0 %v718
    %v816 = vpop.f32.mrb[0].mxu0
    %v817 = vadd.f32 %v706, %v816
    %v818 = vpop.f32.mrb[0].mxu0
    %819 = vmatprep.mubr.f32.mxu0 0.0
    %820 = vmatmul.mubr.f32.gmra.mrb[0].mxu0 %v721
    %v821 = vpop.f32.mrb[0].mxu0
    %v822 = vadd.f32 %v706, %v821
    %v823 = vpop.f32.mrb[0].mxu0
    %824 = vmatprep.mubr.f32.mxu0 0.0
    %825 = vmatmul.mubr.f32.gmra.mrb[0].mxu0 %v724
    %v826 = vpop.f32.mrb[0].mxu0
    %v827 = vadd.f32 %v706, %v826
    %v828 = vpop.f32.mrb[0].mxu0
    %829 = vmatprep.mubr.f32.mxu0 0.0
    %830 = vmatmul.mubr.f32.gmra.mrb[0].mxu0 %v727
    %v831 = vpop.f32.mrb[0].mxu0
    %v832 = vadd.f32 %v706, %v831
    %v833 = vpop.f32.mrb[0].mxu0
    %834 = vmatprep.mubr.f32.mxu0 0.0
    %835 = vmatmul.mubr.f32.gmra.mrb[0].mxu0 %v730
    %v836 = vpop.f32.mrb[0].mxu0
    %v837 = vadd.f32 %v706, %v836
    %v838 = vpop.f32.mrb[0].mxu0
    %839 = vmatprep.mubr.f32.mxu0 0.0
    %840 = vmatmul.mubr.f32.gmra.mrb[0].mxu0 %v733
    %v841 = vpop.f32.mrb[0].mxu0
    %v842 = vadd.f32 %v706, %v841
    %v843 = vpop.f32.mrb[0].mxu0
    %844 = vdwg.mxu0
    %v845 = vld [vmem:[%s3] sm:$0xff]
    %v846 = vld [vmem:[%s3 + $0x8] sm:$0xff]
    %v847 = vld [vmem:[%s3 + $0x10] sm:$0xff]
    %v848 = vld [vmem:[%s3 + $0x18] sm:$0xff]
    %v849 = vld [vmem:[%s3 + $0x20] sm:$0xff]
    %v850 = vld [vmem:[%s3 + $0x28] sm:$0xff]
    %v851 = vld [vmem:[%s3 + $0x30] sm:$0xff]
    %v852 = vld [vmem:[%s3 + $0x38] sm:$0xff]
    %v853 = vsub.f32 %v802, %v845
    %v854 = vsub.f32 %v807, %v846
    %v855 = vsub.f32 %v812, %v847
    %v856 = vsub.f32 %v817, %v848
    %v857 = vsub.f32 %v822, %v849
    %v858 = vsub.f32 %v827, %v850
    %v859 = vsub.f32 %v832, %v851
    %v860 = vsub.f32 %v837, %v852
    %v861 = vmul.f32 %v853, %v853
    %v862 = vmul.f32 %v854, %v854
    %v863 = vmul.f32 %v855, %v855
    %v864 = vmul.f32 %v856, %v856
    %v865 = vmul.f32 %v857, %v857
    %v866 = vmul.f32 %v858, %v858
    %v867 = vmul.f32 %v859, %v859
    %v868 = vmul.f32 %v860, %v860
    %v869 = vsel %vm70, %v861, 0.0
    %v870 = vsel %vm70, %v862, 0.0
    %v871 = vadd.f32 %v869, %v870
    %v872 = vsel %vm70, %v863, 0.0
    %v873 = vadd.f32 %v871, %v872
    %v874 = vsel %vm70, %v864, 0.0
    %v875 = vadd.f32 %v873, %v874
    %v876 = vsel %vm70, %v865, 0.0
    %v877 = vadd.f32 %v875, %v876
    %v878 = vsel %vm70, %v866, 0.0
    %v879 = vadd.f32 %v877, %v878
    %v880 = vsel %vm70, %v867, 0.0
    %v881 = vadd.f32 %v879, %v880
    %v882 = vsel %vm70, %v868, 0.0
    %v883 = vadd.f32 %v881, %v882
    %884 = vadd.xlane.f32.xlu0 %v883
    %v885 = vpop.xlane.xlu0 %884
    %v886 = vrot.slane %v885, 4
    %v887 = vadd.f32 %v885, %v886
    %v888 = vrot.slane %v887, 2
    %v889 = vadd.f32 %v887, %v888
    %v890 = vrot.slane %v889, 1
    %v891 = vadd.f32 %v889, %v890
    %s892 = vtos %v891
    %v893 = vstv %s892
    %v894 = vmul.f32 %v893, 0.001953125
    %v895 = vld [vmem:[%s2] sm:$0xff]
    %v896 = vld [vmem:[%s2 + $0x8] sm:$0xff]
    %v897 = vld [vmem:[%s2 + $0x10] sm:$0xff]
    %v898 = vld [vmem:[%s2 + $0x18] sm:$0xff]
    %v899 = vld [vmem:[%s2 + $0x20] sm:$0xff]
    %v900 = vld [vmem:[%s2 + $0x28] sm:$0xff]
    %v901 = vld [vmem:[%s2 + $0x30] sm:$0xff]
    %v902 = vld [vmem:[%s2 + $0x38] sm:$0xff]
    %v904 = vsel %vm411, %v391, 0
    %v907 = vsel %vm411, %v895, 0
    %v910 = vsel %vm411, %v896, 0
    %v913 = vsel %vm411, %v897, 0
    %v916 = vsel %vm411, %v898, 0
    %v919 = vsel %vm411, %v899, 0
    %v922 = vsel %vm411, %v900, 0
    %v925 = vsel %vm411, %v901, 0
    %v928 = vsel %vm411, %v902, 0
    %930 = vmatprep.subr.mxu0 0.0
    %931 = vmatpush1.xpose.msra.mxu0 %v907
    %932 = vmatprep.subr.mxu0 0.0
    %933 = vmatpush1.xpose.msra.mxu0 %v910
    %934 = vmatprep.subr.mxu0 0.0
    %935 = vmatpush1.xpose.msra.mxu0 %v913
    %936 = vmatprep.subr.mxu0 0.0
    %937 = vmatpush1.xpose.msra.mxu0 %v916
    %938 = vmatprep.subr.mxu0 0.0
    %939 = vmatpush1.xpose.msra.mxu0 %v919
    %940 = vmatprep.subr.mxu0 0.0
    %941 = vmatpush1.xpose.msra.mxu0 %v922
    %942 = vmatprep.subr.mxu0 0.0
    %943 = vmatpush1.xpose.msra.mxu0 %v925
    %944 = vmatprep.subr.mxu0 0.0
    %945 = vmatpush1.xpose.msra.mxu0 %v928
    %946 = vmatprep.subr.mxu0 0.0
    %947 = vmatpush1.xpose.msra.mxu0 0.0
    %948 = vmatprep.subr.mxu0 0.0
    %949 = vmatpush1.xpose.msra.mxu0 0.0
    %950 = vmatprep.subr.mxu0 0.0
    %951 = vmatpush1.xpose.msra.mxu0 0.0
    %952 = vmatprep.subr.mxu0 0.0
    %953 = vmatpush1.xpose.msra.mxu0 0.0
    %954 = vmatprep.subr.mxu0 0.0
    %955 = vmatpush1.xpose.msra.mxu0 0.0
    %956 = vmatprep.subr.mxu0 0.0
    %957 = vmatpush1.xpose.msra.mxu0 0.0
    %958 = vmatprep.subr.mxu0 0.0
    %959 = vmatpush1.xpose.msra.mxu0 0.0
    %960 = vmatprep.subr.mxu0 0.0
    %961 = vmatpush1.xpose.msra.mxu0 0.0
    %962 = vmatprep.subr.mxu0 0.0
    %963 = vmatpush1.xpose.msra.mxu0 0.0
    %964 = vmatprep.subr.mxu0 0.0
    %965 = vmatpush1.xpose.msra.mxu0 0.0
    %966 = vmatprep.subr.mxu0 0.0
    %967 = vmatpush1.xpose.msra.mxu0 0.0
    %968 = vmatprep.subr.mxu0 0.0
    %969 = vmatpush1.xpose.msra.mxu0 0.0
    %970 = vmatprep.subr.mxu0 0.0
    %971 = vmatpush1.xpose.msra.mxu0 0.0
    %972 = vmatprep.subr.mxu0 0.0
    %973 = vmatpush1.xpose.msra.mxu0 0.0
    %974 = vmatprep.subr.mxu0 0.0
    %975 = vmatpush1.xpose.msra.mxu0 0.0
    %976 = vmatprep.subr.mxu0 0.0
    %977 = vmatpush1.xpose.msra.mxu0 0.0
    %978 = vmatprep.subr.mxu0 0.0
    %979 = vmatpush1.xpose.msra.mxu0 0.0
    %980 = vmatprep.subr.mxu0 0.0
    %981 = vmatpush1.xpose.msra.mxu0 0.0
    %982 = vmatprep.subr.mxu0 0.0
    %983 = vmatpush1.xpose.msra.mxu0 0.0
    %984 = vmatprep.subr.mxu0 0.0
    %985 = vmatpush1.xpose.msra.mxu0 0.0
    %986 = vmatprep.subr.mxu0 0.0
    %987 = vmatpush1.xpose.msra.mxu0 0.0
    %988 = vmatprep.subr.mxu0 0.0
    %989 = vmatpush1.xpose.msra.mxu0 0.0
    %990 = vmatprep.subr.mxu0 0.0
    %991 = vmatpush1.xpose.msra.mxu0 0.0
    %992 = vmatprep.subr.mxu0 0.0
    %993 = vmatpush1.xpose.msra.mxu0 0.0
    %994 = vmatprep.mubr.f32.mxu0 0.0
    %995 = vmatmul.mubr.f32.gmra.mrb[0].mxu0 %v904
    %v996 = vpop.f32.mrb[0].mxu0
    %v997 = vadd.f32 0.0, %v996
    %v998 = vpop.f32.mrb[0].mxu0
    %999 = vdwg.mxu0
    %v1000 = vmul.f32 %v391, %v391
    %v1001 = vsel %vm411, %v1000, 0.0
    %1002 = vadd.xlane.f32.xlu0 %v1001
    %v1003 = vpop.xlane.xlu0 %1002
    %v1004 = vmul.f32 %v895, %v895
    %v1005 = vmul.f32 %v896, %v896
    %v1006 = vmul.f32 %v897, %v897
    %v1007 = vmul.f32 %v898, %v898
    %v1008 = vmul.f32 %v899, %v899
    %v1009 = vmul.f32 %v900, %v900
    %v1010 = vmul.f32 %v901, %v901
    %v1011 = vmul.f32 %v902, %v902
    %v1013 = vsel %vm411, 1.0, 0
    %v1016 = vsel %vm411, %v1004, 0
    %v1019 = vsel %vm411, %v1005, 0
    %v1022 = vsel %vm411, %v1006, 0
    %v1025 = vsel %vm411, %v1007, 0
    %v1028 = vsel %vm411, %v1008, 0
    %v1031 = vsel %vm411, %v1009, 0
    %v1034 = vsel %vm411, %v1010, 0
    %v1037 = vsel %vm411, %v1011, 0
    %1039 = vmatprep.subr.mxu0 0.0
    %1040 = vmatpush1.xpose.msra.mxu0 %v1016
    %1041 = vmatprep.subr.mxu0 0.0
    %1042 = vmatpush1.xpose.msra.mxu0 %v1019
    %1043 = vmatprep.subr.mxu0 0.0
    %1044 = vmatpush1.xpose.msra.mxu0 %v1022
    %1045 = vmatprep.subr.mxu0 0.0
    %1046 = vmatpush1.xpose.msra.mxu0 %v1025
    %1047 = vmatprep.subr.mxu0 0.0
    %1048 = vmatpush1.xpose.msra.mxu0 %v1028
    %1049 = vmatprep.subr.mxu0 0.0
    %1050 = vmatpush1.xpose.msra.mxu0 %v1031
    %1051 = vmatprep.subr.mxu0 0.0
    %1052 = vmatpush1.xpose.msra.mxu0 %v1034
    %1053 = vmatprep.subr.mxu0 0.0
    %1054 = vmatpush1.xpose.msra.mxu0 %v1037
    %1055 = vmatprep.subr.mxu0 0.0
    %1056 = vmatpush1.xpose.msra.mxu0 0.0
    %1057 = vmatprep.subr.mxu0 0.0
    %1058 = vmatpush1.xpose.msra.mxu0 0.0
    %1059 = vmatprep.subr.mxu0 0.0
    %1060 = vmatpush1.xpose.msra.mxu0 0.0
    %1061 = vmatprep.subr.mxu0 0.0
    %1062 = vmatpush1.xpose.msra.mxu0 0.0
    %1063 = vmatprep.subr.mxu0 0.0
    %1064 = vmatpush1.xpose.msra.mxu0 0.0
    %1065 = vmatprep.subr.mxu0 0.0
    %1066 = vmatpush1.xpose.msra.mxu0 0.0
    %1067 = vmatprep.subr.mxu0 0.0
    %1068 = vmatpush1.xpose.msra.mxu0 0.0
    %1069 = vmatprep.subr.mxu0 0.0
    %1070 = vmatpush1.xpose.msra.mxu0 0.0
    %1071 = vmatprep.subr.mxu0 0.0
    %1072 = vmatpush1.xpose.msra.mxu0 0.0
    %1073 = vmatprep.subr.mxu0 0.0
    %1074 = vmatpush1.xpose.msra.mxu0 0.0
    %1075 = vmatprep.subr.mxu0 0.0
    %1076 = vmatpush1.xpose.msra.mxu0 0.0
    %1077 = vmatprep.subr.mxu0 0.0
    %1078 = vmatpush1.xpose.msra.mxu0 0.0
    %1079 = vmatprep.subr.mxu0 0.0
    %1080 = vmatpush1.xpose.msra.mxu0 0.0
    %1081 = vmatprep.subr.mxu0 0.0
    %1082 = vmatpush1.xpose.msra.mxu0 0.0
    %1083 = vmatprep.subr.mxu0 0.0
    %1084 = vmatpush1.xpose.msra.mxu0 0.0
    %1085 = vmatprep.subr.mxu0 0.0
    %1086 = vmatpush1.xpose.msra.mxu0 0.0
    %1087 = vmatprep.subr.mxu0 0.0
    %1088 = vmatpush1.xpose.msra.mxu0 0.0
    %1089 = vmatprep.subr.mxu0 0.0
    %1090 = vmatpush1.xpose.msra.mxu0 0.0
    %1091 = vmatprep.subr.mxu0 0.0
    %1092 = vmatpush1.xpose.msra.mxu0 0.0
    %1093 = vmatprep.subr.mxu0 0.0
    %1094 = vmatpush1.xpose.msra.mxu0 0.0
    %1095 = vmatprep.subr.mxu0 0.0
    %1096 = vmatpush1.xpose.msra.mxu0 0.0
    %1097 = vmatprep.subr.mxu0 0.0
    %1098 = vmatpush1.xpose.msra.mxu0 0.0
    %1099 = vmatprep.subr.mxu0 0.0
    %1100 = vmatpush1.xpose.msra.mxu0 0.0
    %1101 = vmatprep.subr.mxu0 0.0
    %1102 = vmatpush1.xpose.msra.mxu0 0.0
    %1103 = vmatprep.mubr.f32.mxu0 0.0
    %1104 = vmatmul.mubr.f32.gmra.mrb[0].mxu0 %v1013
    %v1105 = vpop.f32.mrb[0].mxu0
    %v1106 = vadd.f32 0.0, %v1105
    %v1107 = vpop.f32.mrb[0].mxu0
    %1108 = vdwg.mxu0
    %v1109 = vlaneseq
    %v1110 = vshrl.u32 %v1109, 7
    %v1111 = vsub.s32 0, %v1110
    %v1112 = vrot.slane %v1106, %v1111
    %v1113 = vadd.f32 %v1003, %v1112
    %v1114 = vmul.f32 %v997, 2.0
    %v1115 = vsub.f32 %v1113, %v1114
    %v1116 = vmul.f32 %v1115, 0.0625
    %vm1117 = vcmask 523264
    %v1118 = vsel %vm1117, %v1116, inf
    %1119 = vmin.xlane.f32.xlu0 %v1118
    %v1120 = vpop.xlane.xlu0 %1119
    %vm1121 = vcmask 7168
    %v1122 = vsel %vm1121, %v1120, 0.0
    %1123 = vadd.xlane.f32.xlu0 %v1122
    %v1124 = vpop.xlane.xlu0 %1123
    %v1125 = vrot.slane %v1124, 4
    %v1126 = vadd.f32 %v1124, %v1125
    %v1127 = vrot.slane %v1126, 2
    %v1128 = vadd.f32 %v1126, %v1127
    %v1129 = vrot.slane %v1128, 1
    %v1130 = vadd.f32 %v1128, %v1129
    %s1131 = vtos %v1130
    %v1132 = vstv %s1131
    %v1133 = vrcp.pop 8.0
    %v1134 = vmul.f32 %v1132, %v1133
    %v1135 = vsel %vm70, %v842, 0.0
    %v1136 = vrot.slane %v1135, 4
    %v1137 = vadd.f32 %v1135, %v1136
    %v1138 = vrot.slane %v1137, 2
    %v1139 = vadd.f32 %v1137, %v1138
    %v1140 = vrot.slane %v1139, 1
    %v1141 = vadd.f32 %v1139, %v1140
    %v1142 = vmul.f32 %v1141, 0.125
    %v1143 = vsub.f32 %v842, %v1142
    %1144 = vxpose.xlu0.b32.start [1/16] %v1143, 128
    %1145 = vxpose.xlu0.b32.cont [2/16] 0.0, 128
    %1146 = vxpose.xlu0.b32.cont [3/16] 0.0, 128
    %1147 = vxpose.xlu0.b32.cont [4/16] 0.0, 128
    %1148 = vxpose.xlu0.b32.cont [5/16] 0.0, 128
    %1149 = vxpose.xlu0.b32.cont [6/16] 0.0, 128
    %1150 = vxpose.xlu0.b32.cont [7/16] 0.0, 128
    %1151 = vxpose.xlu0.b32.cont [8/16] 0.0, 128
    %1152 = vxpose.xlu0.b32.cont [9/16] 0.0, 128
    %1153 = vxpose.xlu0.b32.cont [10/16] 0.0, 128
    %1154 = vxpose.xlu0.b32.cont [11/16] 0.0, 128
    %1155 = vxpose.xlu0.b32.cont [12/16] 0.0, 128
    %1156 = vxpose.xlu0.b32.cont [13/16] 0.0, 128
    %1157 = vxpose.xlu0.b32.cont [14/16] 0.0, 128
    %1158 = vxpose.xlu0.b32.cont [15/16] 0.0, 128
    %1159 = vxpose.xlu0.b32.end [16/16] 0.0, 128
    %v1160 = vpop.trf.xlu0
    %v1161 = vpop.trf.xlu0
    %v1162 = vpop.trf.xlu0
    %v1163 = vpop.trf.xlu0
    %v1164 = vpop.trf.xlu0
    %v1165 = vpop.trf.xlu0
    %v1166 = vpop.trf.xlu0
    %v1167 = vpop.trf.xlu0
    %v1168 = vpop.trf.xlu0
    %v1169 = vpop.trf.xlu0
    %v1170 = vpop.trf.xlu0
    %v1171 = vpop.trf.xlu0
    %v1172 = vpop.trf.xlu0
    %v1173 = vpop.trf.xlu0
    %v1174 = vpop.trf.xlu0
    %v1175 = vpop.trf.xlu0
    %v1177 = vsel %vm70, %v1160, 0
    %1179 = vmatprep.subr.mxu0 0.0
    %1180 = vmatpush1.msra.mxu0 %v1143
    %1181 = vmatprep.subr.mxu0 0.0
    %1182 = vmatpush1.msra.mxu0 0.0
    %1183 = vmatprep.subr.mxu0 0.0
    %1184 = vmatpush1.msra.mxu0 0.0
    %1185 = vmatprep.subr.mxu0 0.0
    %1186 = vmatpush1.msra.mxu0 0.0
    %1187 = vmatprep.subr.mxu0 0.0
    %1188 = vmatpush1.msra.mxu0 0.0
    %1189 = vmatprep.subr.mxu0 0.0
    %1190 = vmatpush1.msra.mxu0 0.0
    %1191 = vmatprep.subr.mxu0 0.0
    %1192 = vmatpush1.msra.mxu0 0.0
    %1193 = vmatprep.subr.mxu0 0.0
    %1194 = vmatpush1.msra.mxu0 0.0
    %1195 = vmatprep.subr.mxu0 0.0
    %1196 = vmatpush1.msra.mxu0 0.0
    %1197 = vmatprep.subr.mxu0 0.0
    %1198 = vmatpush1.msra.mxu0 0.0
    %1199 = vmatprep.subr.mxu0 0.0
    %1200 = vmatpush1.msra.mxu0 0.0
    %1201 = vmatprep.subr.mxu0 0.0
    %1202 = vmatpush1.msra.mxu0 0.0
    %1203 = vmatprep.subr.mxu0 0.0
    %1204 = vmatpush1.msra.mxu0 0.0
    %1205 = vmatprep.subr.mxu0 0.0
    %1206 = vmatpush1.msra.mxu0 0.0
    %1207 = vmatprep.subr.mxu0 0.0
    %1208 = vmatpush1.msra.mxu0 0.0
    %1209 = vmatprep.subr.mxu0 0.0
    %1210 = vmatpush1.msra.mxu0 0.0
    %1211 = vmatprep.subr.mxu0 0.0
    %1212 = vmatpush1.msra.mxu0 0.0
    %1213 = vmatprep.subr.mxu0 0.0
    %1214 = vmatpush1.msra.mxu0 0.0
    %1215 = vmatprep.subr.mxu0 0.0
    %1216 = vmatpush1.msra.mxu0 0.0
    %1217 = vmatprep.subr.mxu0 0.0
    %1218 = vmatpush1.msra.mxu0 0.0
    %1219 = vmatprep.subr.mxu0 0.0
    %1220 = vmatpush1.msra.mxu0 0.0
    %1221 = vmatprep.subr.mxu0 0.0
    %1222 = vmatpush1.msra.mxu0 0.0
    %1223 = vmatprep.subr.mxu0 0.0
    %1224 = vmatpush1.msra.mxu0 0.0
    %1225 = vmatprep.subr.mxu0 0.0
    %1226 = vmatpush1.msra.mxu0 0.0
    %1227 = vmatprep.subr.mxu0 0.0
    %1228 = vmatpush1.msra.mxu0 0.0
    %1229 = vmatprep.subr.mxu0 0.0
    %1230 = vmatpush1.msra.mxu0 0.0
    %1231 = vmatprep.subr.mxu0 0.0
    %1232 = vmatpush1.msra.mxu0 0.0
    %1233 = vmatprep.subr.mxu0 0.0
    %1234 = vmatpush1.msra.mxu0 0.0
    %1235 = vmatprep.subr.mxu0 0.0
    %1236 = vmatpush1.msra.mxu0 0.0
    %1237 = vmatprep.subr.mxu0 0.0
    %1238 = vmatpush1.msra.mxu0 0.0
    %1239 = vmatprep.subr.mxu0 0.0
    %1240 = vmatpush1.msra.mxu0 0.0
    %1241 = vmatprep.subr.mxu0 0.0
    %1242 = vmatpush1.msra.mxu0 0.0
    %1243 = vmatprep.mubr.f32.mxu0 0.0
    %1244 = vmatmul.mubr.f32.gmra.mrb[0].mxu0 %v1177
    %v1245 = vpop.f32.mrb[0].mxu0
    %v1246 = vadd.f32 0.0, %v1245
    %v1247 = vpop.f32.mrb[0].mxu0
    %1248 = vdwg.mxu0
    %v1249 = vmul.f32 %v1246, %v61
    %v1250 = vsel %vm70, %v1249, 0.0
    %v1251 = vrot.slane %v1250, 4
    %v1252 = vadd.f32 %v1250, %v1251
    %v1253 = vrot.slane %v1252, 2
    %v1254 = vadd.f32 %v1252, %v1253
    %v1255 = vrot.slane %v1254, 1
    %v1256 = vadd.f32 %v1254, %v1255
    %1257 = vadd.xlane.f32.xlu0 %v1250
    %v1258 = vpop.xlane.xlu0 %1257
    %v1259 = vrcp.pop %v1256
    %v1260 = vmul.f32 1.0, %v1259
    %v1261 = vmul.f32 %v1246, %v1246
    %v1262 = vmul.f32 %v1258, %v1256
    %v1263 = vrcp.pop %v1262
    %v1264 = vmul.f32 %v1261, %v1263
    %v1266 = vsel %vm70, %v61, 0
    %1268 = vmatprep.subr.mxu0 0.0
    %1269 = vmatpush1.xpose.msra.mxu0 %v72
    %1270 = vmatprep.subr.mxu0 0.0
    %1271 = vmatpush1.xpose.msra.mxu0 0.0
    %1272 = vmatprep.subr.mxu0 0.0
    %1273 = vmatpush1.xpose.msra.mxu0 0.0
    %1274 = vmatprep.subr.mxu0 0.0
    %1275 = vmatpush1.xpose.msra.mxu0 0.0
    %1276 = vmatprep.subr.mxu0 0.0
    %1277 = vmatpush1.xpose.msra.mxu0 0.0
    %1278 = vmatprep.subr.mxu0 0.0
    %1279 = vmatpush1.xpose.msra.mxu0 0.0
    %1280 = vmatprep.subr.mxu0 0.0
    %1281 = vmatpush1.xpose.msra.mxu0 0.0
    %1282 = vmatprep.subr.mxu0 0.0
    %1283 = vmatpush1.xpose.msra.mxu0 0.0
    %1284 = vmatprep.subr.mxu0 0.0
    %1285 = vmatpush1.xpose.msra.mxu0 0.0
    %1286 = vmatprep.subr.mxu0 0.0
    %1287 = vmatpush1.xpose.msra.mxu0 0.0
    %1288 = vmatprep.subr.mxu0 0.0
    %1289 = vmatpush1.xpose.msra.mxu0 0.0
    %1290 = vmatprep.subr.mxu0 0.0
    %1291 = vmatpush1.xpose.msra.mxu0 0.0
    %1292 = vmatprep.subr.mxu0 0.0
    %1293 = vmatpush1.xpose.msra.mxu0 0.0
    %1294 = vmatprep.subr.mxu0 0.0
    %1295 = vmatpush1.xpose.msra.mxu0 0.0
    %1296 = vmatprep.subr.mxu0 0.0
    %1297 = vmatpush1.xpose.msra.mxu0 0.0
    %1298 = vmatprep.subr.mxu0 0.0
    %1299 = vmatpush1.xpose.msra.mxu0 0.0
    %1300 = vmatprep.subr.mxu0 0.0
    %1301 = vmatpush1.xpose.msra.mxu0 0.0
    %1302 = vmatprep.subr.mxu0 0.0
    %1303 = vmatpush1.xpose.msra.mxu0 0.0
    %1304 = vmatprep.subr.mxu0 0.0
    %1305 = vmatpush1.xpose.msra.mxu0 0.0
    %1306 = vmatprep.subr.mxu0 0.0
    %1307 = vmatpush1.xpose.msra.mxu0 0.0
    %1308 = vmatprep.subr.mxu0 0.0
    %1309 = vmatpush1.xpose.msra.mxu0 0.0
    %1310 = vmatprep.subr.mxu0 0.0
    %1311 = vmatpush1.xpose.msra.mxu0 0.0
    %1312 = vmatprep.subr.mxu0 0.0
    %1313 = vmatpush1.xpose.msra.mxu0 0.0
    %1314 = vmatprep.subr.mxu0 0.0
    %1315 = vmatpush1.xpose.msra.mxu0 0.0
    %1316 = vmatprep.subr.mxu0 0.0
    %1317 = vmatpush1.xpose.msra.mxu0 0.0
    %1318 = vmatprep.subr.mxu0 0.0
    %1319 = vmatpush1.xpose.msra.mxu0 0.0
    %1320 = vmatprep.subr.mxu0 0.0
    %1321 = vmatpush1.xpose.msra.mxu0 0.0
    %1322 = vmatprep.subr.mxu0 0.0
    %1323 = vmatpush1.xpose.msra.mxu0 0.0
    %1324 = vmatprep.subr.mxu0 0.0
    %1325 = vmatpush1.xpose.msra.mxu0 0.0
    %1326 = vmatprep.subr.mxu0 0.0
    %1327 = vmatpush1.xpose.msra.mxu0 0.0
    %1328 = vmatprep.subr.mxu0 0.0
    %1329 = vmatpush1.xpose.msra.mxu0 0.0
    %1330 = vmatprep.subr.mxu0 0.0
    %1331 = vmatpush1.xpose.msra.mxu0 0.0
    %1332 = vmatprep.mubr.f32.mxu0 0.0
    %1333 = vmatmul.mubr.f32.gmra.mrb[0].mxu0 %v1266
    %v1334 = vpop.f32.mrb[0].mxu0
    %v1335 = vadd.f32 0.0, %v1334
    %v1336 = vpop.f32.mrb[0].mxu0
    %1337 = vdwg.mxu0
    %v1338 = vadd.f32 %v69, %v1335
    %vm1339 = vcmp.ne.s32.totalorder %v58, %v55
    %v1340 = vmul.f32 %v1246, %v1260
    %1342 = vset.pattern.permute.xlu0 0
    %1343 = vperm.xlu0 %1342, %v1340
    %v1344 = vpop.permute.xlu0 %1343
    %v1346 = vlaneseq
    %v1347 = vshrl.u32 %v1346, 7
    %v1348 = vsub.s32 0, %v1347
    %v1349 = vrot.slane %v1246, %v1348
    %v1350 = vmul.f32 %v1344, %v1349
    %v1351 = vsub.f32 %v1246, %v1350
    %vm1352 = vcmp.ne.s32.totalorder %v58, 0
    %vm1353 = vmand %vm1339, %vm1352
    %vm1354 = vcmp.ne.s32.totalorder %v55, 0
    %vm1355 = vmand %vm1353, %vm1354
    %v1356 = vmul.f32 %v1261, %v1260
    %v1357 = vsub.f32 %v1258, %v1356
    %1359 = vset.pattern.permute.xlu0 0
    %1360 = vperm.xlu0 %1359, %v1260
    %v1361 = vpop.permute.xlu0 %1360
    %v1363 = vmul.f32 %v1261, %v1361
    %v1364 = vsub.f32 %v1256, %v1363
    %1366 = vset.pattern.permute.xlu0 0
    %1367 = vperm.xlu0 %1366, %v1357
    %v1368 = vpop.permute.xlu0 %1367
    %v1370 = vlaneseq
    %v1371 = vshrl.u32 %v1370, 7
    %v1372 = vsub.s32 0, %v1371
    %v1373 = vrot.slane %v1364, %v1372
    %v1374 = vmul.f32 %v1368, %v1373
    %v1375 = vsel %vm1355, %v1374, 1.0
    %v1376 = vmul.f32 %v1351, %v1351
    %v1377 = vrcp.pop %v1375
    %v1378 = vmul.f32 %v1376, %v1377
    %1380 = vset.pattern.permute.xlu0 0
    %1381 = vperm.xlu0 %1380, %v1338
    %v1382 = vpop.permute.xlu0 %1381
    %v1384 = vlaneseq
    %v1385 = vshrl.u32 %v1384, 7
    %v1386 = vsub.s32 0, %v1385
    %v1387 = vrot.slane %v69, %v1386
    %v1388 = vmul.f32 %v1382, %v1387
    %v1389 = vmul.f32 %v1388, %v1378
    %v1390 = vsub.f32 1.0, %v1388
    %v1391 = vsub.f32 1.0, %v1378
    %v1392 = vmul.f32 %v1390, %v1391
    %v1393 = vadd.f32 %v1389, %v1392
    %v1394 = vmul.f32 %v1393, %v1264
    %v1395 = vsel %vm1355, %v1394, 0.0
    %v1396 = vadd.f32 %v1395, 0.0
    %1397 = vset.pattern.permute.xlu0 1
    %1398 = vperm.xlu0 %1397, %v1340
    %v1399 = vpop.permute.xlu0 %1398
    %v1401 = vlaneseq
    %v1402 = vshrl.u32 %v1401, 7
    %v1403 = vsub.s32 1, %v1402
    %v1404 = vrot.slane %v1246, %v1403
    %v1405 = vmul.f32 %v1399, %v1404
    %v1406 = vsub.f32 %v1246, %v1405
    %vm1407 = vcmp.ne.s32.totalorder %v58, 1
    %vm1408 = vmand %vm1339, %vm1407
    %vm1409 = vcmp.ne.s32.totalorder %v55, 1
    %vm1410 = vmand %vm1408, %vm1409
    %1411 = vset.pattern.permute.xlu0 1
    %1412 = vperm.xlu0 %1411, %v1260
    %v1413 = vpop.permute.xlu0 %1412
    %v1415 = vmul.f32 %v1261, %v1413
    %v1416 = vsub.f32 %v1256, %v1415
    %1417 = vset.pattern.permute.xlu0 1
    %1418 = vperm.xlu0 %1417, %v1357
    %v1419 = vpop.permute.xlu0 %1418
    %v1421 = vlaneseq
    %v1422 = vshrl.u32 %v1421, 7
    %v1423 = vsub.s32 1, %v1422
    %v1424 = vrot.slane %v1416, %v1423
    %v1425 = vmul.f32 %v1419, %v1424
    %v1426 = vsel %vm1410, %v1425, 1.0
    %v1427 = vmul.f32 %v1406, %v1406
    %v1428 = vrcp.pop %v1426
    %v1429 = vmul.f32 %v1427, %v1428
    %1430 = vset.pattern.permute.xlu0 1
    %1431 = vperm.xlu0 %1430, %v1338
    %v1432 = vpop.permute.xlu0 %1431
    %v1434 = vlaneseq
    %v1435 = vshrl.u32 %v1434, 7
    %v1436 = vsub.s32 1, %v1435
    %v1437 = vrot.slane %v69, %v1436
    %v1438 = vmul.f32 %v1432, %v1437
    %v1439 = vmul.f32 %v1438, %v1429
    %v1440 = vsub.f32 1.0, %v1438
    %v1441 = vsub.f32 1.0, %v1429
    %v1442 = vmul.f32 %v1440, %v1441
    %v1443 = vadd.f32 %v1439, %v1442
    %v1444 = vmul.f32 %v1443, %v1264
    %v1445 = vsel %vm1410, %v1444, 0.0
    %v1446 = vadd.f32 %v1396, %v1445
    %1447 = vset.pattern.permute.xlu0 2
    %1448 = vperm.xlu0 %1447, %v1340
    %v1449 = vpop.permute.xlu0 %1448
    %v1451 = vlaneseq
    %v1452 = vshrl.u32 %v1451, 7
    %v1453 = vsub.s32 2, %v1452
    %v1454 = vrot.slane %v1246, %v1453
    %v1455 = vmul.f32 %v1449, %v1454
    %v1456 = vsub.f32 %v1246, %v1455
    %vm1457 = vcmp.ne.s32.totalorder %v58, 2
    %vm1458 = vmand %vm1339, %vm1457
    %vm1459 = vcmp.ne.s32.totalorder %v55, 2
    %vm1460 = vmand %vm1458, %vm1459
    %1461 = vset.pattern.permute.xlu0 2
    %1462 = vperm.xlu0 %1461, %v1260
    %v1463 = vpop.permute.xlu0 %1462
    %v1465 = vmul.f32 %v1261, %v1463
    %v1466 = vsub.f32 %v1256, %v1465
    %1467 = vset.pattern.permute.xlu0 2
    %1468 = vperm.xlu0 %1467, %v1357
    %v1469 = vpop.permute.xlu0 %1468
    %v1471 = vlaneseq
    %v1472 = vshrl.u32 %v1471, 7
    %v1473 = vsub.s32 2, %v1472
    %v1474 = vrot.slane %v1466, %v1473
    %v1475 = vmul.f32 %v1469, %v1474
    %v1476 = vsel %vm1460, %v1475, 1.0
    %v1477 = vmul.f32 %v1456, %v1456
    %v1478 = vrcp.pop %v1476
    %v1479 = vmul.f32 %v1477, %v1478
    %1480 = vset.pattern.permute.xlu0 2
    %1481 = vperm.xlu0 %1480, %v1338
    %v1482 = vpop.permute.xlu0 %1481
    %v1484 = vlaneseq
    %v1485 = vshrl.u32 %v1484, 7
    %v1486 = vsub.s32 2, %v1485
    %v1487 = vrot.slane %v69, %v1486
    %v1488 = vmul.f32 %v1482, %v1487
    %v1489 = vmul.f32 %v1488, %v1479
    %v1490 = vsub.f32 1.0, %v1488
    %v1491 = vsub.f32 1.0, %v1479
    %v1492 = vmul.f32 %v1490, %v1491
    %v1493 = vadd.f32 %v1489, %v1492
    %v1494 = vmul.f32 %v1493, %v1264
    %v1495 = vsel %vm1460, %v1494, 0.0
    %v1496 = vadd.f32 %v1446, %v1495
    %1497 = vset.pattern.permute.xlu0 3
    %1498 = vperm.xlu0 %1497, %v1340
    %v1499 = vpop.permute.xlu0 %1498
    %v1501 = vlaneseq
    %v1502 = vshrl.u32 %v1501, 7
    %v1503 = vsub.s32 3, %v1502
    %v1504 = vrot.slane %v1246, %v1503
    %v1505 = vmul.f32 %v1499, %v1504
    %v1506 = vsub.f32 %v1246, %v1505
    %vm1507 = vcmp.ne.s32.totalorder %v58, 3
    %vm1508 = vmand %vm1339, %vm1507
    %vm1509 = vcmp.ne.s32.totalorder %v55, 3
    %vm1510 = vmand %vm1508, %vm1509
    %1511 = vset.pattern.permute.xlu0 3
    %1512 = vperm.xlu0 %1511, %v1260
    %v1513 = vpop.permute.xlu0 %1512
    %v1515 = vmul.f32 %v1261, %v1513
    %v1516 = vsub.f32 %v1256, %v1515
    %1517 = vset.pattern.permute.xlu0 3
    %1518 = vperm.xlu0 %1517, %v1357
    %v1519 = vpop.permute.xlu0 %1518
    %v1521 = vlaneseq
    %v1522 = vshrl.u32 %v1521, 7
    %v1523 = vsub.s32 3, %v1522
    %v1524 = vrot.slane %v1516, %v1523
    %v1525 = vmul.f32 %v1519, %v1524
    %v1526 = vsel %vm1510, %v1525, 1.0
    %v1527 = vmul.f32 %v1506, %v1506
    %v1528 = vrcp.pop %v1526
    %v1529 = vmul.f32 %v1527, %v1528
    %1530 = vset.pattern.permute.xlu0 3
    %1531 = vperm.xlu0 %1530, %v1338
    %v1532 = vpop.permute.xlu0 %1531
    %v1534 = vlaneseq
    %v1535 = vshrl.u32 %v1534, 7
    %v1536 = vsub.s32 3, %v1535
    %v1537 = vrot.slane %v69, %v1536
    %v1538 = vmul.f32 %v1532, %v1537
    %v1539 = vmul.f32 %v1538, %v1529
    %v1540 = vsub.f32 1.0, %v1538
    %v1541 = vsub.f32 1.0, %v1529
    %v1542 = vmul.f32 %v1540, %v1541
    %v1543 = vadd.f32 %v1539, %v1542
    %v1544 = vmul.f32 %v1543, %v1264
    %v1545 = vsel %vm1510, %v1544, 0.0
    %v1546 = vadd.f32 %v1496, %v1545
    %1547 = vset.pattern.permute.xlu0 4
    %1548 = vperm.xlu0 %1547, %v1340
    %v1549 = vpop.permute.xlu0 %1548
    %v1551 = vlaneseq
    %v1552 = vshrl.u32 %v1551, 7
    %v1553 = vsub.s32 4, %v1552
    %v1554 = vrot.slane %v1246, %v1553
    %v1555 = vmul.f32 %v1549, %v1554
    %v1556 = vsub.f32 %v1246, %v1555
    %vm1557 = vcmp.ne.s32.totalorder %v58, 4
    %vm1558 = vmand %vm1339, %vm1557
    %vm1559 = vcmp.ne.s32.totalorder %v55, 4
    %vm1560 = vmand %vm1558, %vm1559
    %1561 = vset.pattern.permute.xlu0 4
    %1562 = vperm.xlu0 %1561, %v1260
    %v1563 = vpop.permute.xlu0 %1562
    %v1565 = vmul.f32 %v1261, %v1563
    %v1566 = vsub.f32 %v1256, %v1565
    %1567 = vset.pattern.permute.xlu0 4
    %1568 = vperm.xlu0 %1567, %v1357
    %v1569 = vpop.permute.xlu0 %1568
    %v1571 = vlaneseq
    %v1572 = vshrl.u32 %v1571, 7
    %v1573 = vsub.s32 4, %v1572
    %v1574 = vrot.slane %v1566, %v1573
    %v1575 = vmul.f32 %v1569, %v1574
    %v1576 = vsel %vm1560, %v1575, 1.0
    %v1577 = vmul.f32 %v1556, %v1556
    %v1578 = vrcp.pop %v1576
    %v1579 = vmul.f32 %v1577, %v1578
    %1580 = vset.pattern.permute.xlu0 4
    %1581 = vperm.xlu0 %1580, %v1338
    %v1582 = vpop.permute.xlu0 %1581
    %v1584 = vlaneseq
    %v1585 = vshrl.u32 %v1584, 7
    %v1586 = vsub.s32 4, %v1585
    %v1587 = vrot.slane %v69, %v1586
    %v1588 = vmul.f32 %v1582, %v1587
    %v1589 = vmul.f32 %v1588, %v1579
    %v1590 = vsub.f32 1.0, %v1588
    %v1591 = vsub.f32 1.0, %v1579
    %v1592 = vmul.f32 %v1590, %v1591
    %v1593 = vadd.f32 %v1589, %v1592
    %v1594 = vmul.f32 %v1593, %v1264
    %v1595 = vsel %vm1560, %v1594, 0.0
    %v1596 = vadd.f32 %v1546, %v1595
    %1597 = vset.pattern.permute.xlu0 5
    %1598 = vperm.xlu0 %1597, %v1340
    %v1599 = vpop.permute.xlu0 %1598
    %v1601 = vlaneseq
    %v1602 = vshrl.u32 %v1601, 7
    %v1603 = vsub.s32 5, %v1602
    %v1604 = vrot.slane %v1246, %v1603
    %v1605 = vmul.f32 %v1599, %v1604
    %v1606 = vsub.f32 %v1246, %v1605
    %vm1607 = vcmp.ne.s32.totalorder %v58, 5
    %vm1608 = vmand %vm1339, %vm1607
    %vm1609 = vcmp.ne.s32.totalorder %v55, 5
    %vm1610 = vmand %vm1608, %vm1609
    %1611 = vset.pattern.permute.xlu0 5
    %1612 = vperm.xlu0 %1611, %v1260
    %v1613 = vpop.permute.xlu0 %1612
    %v1615 = vmul.f32 %v1261, %v1613
    %v1616 = vsub.f32 %v1256, %v1615
    %1617 = vset.pattern.permute.xlu0 5
    %1618 = vperm.xlu0 %1617, %v1357
    %v1619 = vpop.permute.xlu0 %1618
    %v1621 = vlaneseq
    %v1622 = vshrl.u32 %v1621, 7
    %v1623 = vsub.s32 5, %v1622
    %v1624 = vrot.slane %v1616, %v1623
    %v1625 = vmul.f32 %v1619, %v1624
    %v1626 = vsel %vm1610, %v1625, 1.0
    %v1627 = vmul.f32 %v1606, %v1606
    %v1628 = vrcp.pop %v1626
    %v1629 = vmul.f32 %v1627, %v1628
    %1630 = vset.pattern.permute.xlu0 5
    %1631 = vperm.xlu0 %1630, %v1338
    %v1632 = vpop.permute.xlu0 %1631
    %v1634 = vlaneseq
    %v1635 = vshrl.u32 %v1634, 7
    %v1636 = vsub.s32 5, %v1635
    %v1637 = vrot.slane %v69, %v1636
    %v1638 = vmul.f32 %v1632, %v1637
    %v1639 = vmul.f32 %v1638, %v1629
    %v1640 = vsub.f32 1.0, %v1638
    %v1641 = vsub.f32 1.0, %v1629
    %v1642 = vmul.f32 %v1640, %v1641
    %v1643 = vadd.f32 %v1639, %v1642
    %v1644 = vmul.f32 %v1643, %v1264
    %v1645 = vsel %vm1610, %v1644, 0.0
    %v1646 = vadd.f32 %v1596, %v1645
    %1647 = vset.pattern.permute.xlu0 6
    %1648 = vperm.xlu0 %1647, %v1340
    %v1649 = vpop.permute.xlu0 %1648
    %v1651 = vlaneseq
    %v1652 = vshrl.u32 %v1651, 7
    %v1653 = vsub.s32 6, %v1652
    %v1654 = vrot.slane %v1246, %v1653
    %v1655 = vmul.f32 %v1649, %v1654
    %v1656 = vsub.f32 %v1246, %v1655
    %vm1657 = vcmp.ne.s32.totalorder %v58, 6
    %vm1658 = vmand %vm1339, %vm1657
    %vm1659 = vcmp.ne.s32.totalorder %v55, 6
    %vm1660 = vmand %vm1658, %vm1659
    %1661 = vset.pattern.permute.xlu0 6
    %1662 = vperm.xlu0 %1661, %v1260
    %v1663 = vpop.permute.xlu0 %1662
    %v1665 = vmul.f32 %v1261, %v1663
    %v1666 = vsub.f32 %v1256, %v1665
    %1667 = vset.pattern.permute.xlu0 6
    %1668 = vperm.xlu0 %1667, %v1357
    %v1669 = vpop.permute.xlu0 %1668
    %v1671 = vlaneseq
    %v1672 = vshrl.u32 %v1671, 7
    %v1673 = vsub.s32 6, %v1672
    %v1674 = vrot.slane %v1666, %v1673
    %v1675 = vmul.f32 %v1669, %v1674
    %v1676 = vsel %vm1660, %v1675, 1.0
    %v1677 = vmul.f32 %v1656, %v1656
    %v1678 = vrcp.pop %v1676
    %v1679 = vmul.f32 %v1677, %v1678
    %1680 = vset.pattern.permute.xlu0 6
    %1681 = vperm.xlu0 %1680, %v1338
    %v1682 = vpop.permute.xlu0 %1681
    %v1684 = vlaneseq
    %v1685 = vshrl.u32 %v1684, 7
    %v1686 = vsub.s32 6, %v1685
    %v1687 = vrot.slane %v69, %v1686
    %v1688 = vmul.f32 %v1682, %v1687
    %v1689 = vmul.f32 %v1688, %v1679
    %v1690 = vsub.f32 1.0, %v1688
    %v1691 = vsub.f32 1.0, %v1679
    %v1692 = vmul.f32 %v1690, %v1691
    %v1693 = vadd.f32 %v1689, %v1692
    %v1694 = vmul.f32 %v1693, %v1264
    %v1695 = vsel %vm1660, %v1694, 0.0
    %v1696 = vadd.f32 %v1646, %v1695
    %1697 = vset.pattern.permute.xlu0 7
    %1698 = vperm.xlu0 %1697, %v1340
    %v1699 = vpop.permute.xlu0 %1698
    %v1701 = vlaneseq
    %v1702 = vshrl.u32 %v1701, 7
    %v1703 = vsub.s32 7, %v1702
    %v1704 = vrot.slane %v1246, %v1703
    %v1705 = vmul.f32 %v1699, %v1704
    %v1706 = vsub.f32 %v1246, %v1705
    %vm1707 = vcmp.ne.s32.totalorder %v58, 7
    %vm1708 = vmand %vm1339, %vm1707
    %vm1709 = vcmp.ne.s32.totalorder %v55, 7
    %vm1710 = vmand %vm1708, %vm1709
    %1711 = vset.pattern.permute.xlu0 7
    %1712 = vperm.xlu0 %1711, %v1260
    %v1713 = vpop.permute.xlu0 %1712
    %v1715 = vmul.f32 %v1261, %v1713
    %v1716 = vsub.f32 %v1256, %v1715
    %1717 = vset.pattern.permute.xlu0 7
    %1718 = vperm.xlu0 %1717, %v1357
    %v1719 = vpop.permute.xlu0 %1718
    %v1721 = vlaneseq
    %v1722 = vshrl.u32 %v1721, 7
    %v1723 = vsub.s32 7, %v1722
    %v1724 = vrot.slane %v1716, %v1723
    %v1725 = vmul.f32 %v1719, %v1724
    %v1726 = vsel %vm1710, %v1725, 1.0
    %v1727 = vmul.f32 %v1706, %v1706
    %v1728 = vrcp.pop %v1726
    %v1729 = vmul.f32 %v1727, %v1728
    %1730 = vset.pattern.permute.xlu0 7
    %1731 = vperm.xlu0 %1730, %v1338
    %v1732 = vpop.permute.xlu0 %1731
    %v1734 = vlaneseq
    %v1735 = vshrl.u32 %v1734, 7
    %v1736 = vsub.s32 7, %v1735
    %v1737 = vrot.slane %v69, %v1736
    %v1738 = vmul.f32 %v1732, %v1737
    %v1739 = vmul.f32 %v1738, %v1729
    %v1740 = vsub.f32 1.0, %v1738
    %v1741 = vsub.f32 1.0, %v1729
    %v1742 = vmul.f32 %v1740, %v1741
    %v1743 = vadd.f32 %v1739, %v1742
    %v1744 = vmul.f32 %v1743, %v1264
    %v1745 = vsel %vm1710, %v1744, 0.0
    %v1746 = vadd.f32 %v1696, %v1745
    %v1747 = vsel %vm70, %v1746, 0.0
    %1748 = vadd.xlane.f32.xlu0 %v1747
    %v1749 = vpop.xlane.xlu0 %1748
    %v1750 = vrot.slane %v1749, 4
    %v1751 = vadd.f32 %v1749, %v1750
    %v1752 = vrot.slane %v1751, 2
    %v1753 = vadd.f32 %v1751, %v1752
    %v1754 = vrot.slane %v1753, 1
    %v1755 = vadd.f32 %v1753, %v1754
    %s1756 = vtos %v1755
    %vm1757 = vcmp.eq.s32.totalorder %v55, 0
    %v1758 = vsel %vm1757, 1, 0
    %v1759 = vcvt.s32.f32 %v1758
    %v1760 = vstv %s155
    %v1761 = vmul.f32 %v1760, %v1759
    %v1762 = vadd.f32 %v1761, 0.0
    %vm1763 = vcmp.eq.s32.totalorder %v55, 1
    %v1764 = vsel %vm1763, 1, 0
    %v1765 = vcvt.s32.f32 %v1764
    %v1766 = vmul.f32 %v894, %v1765
    %v1767 = vadd.f32 %v1762, %v1766
    %vm1768 = vcmp.eq.s32.totalorder %v55, 2
    %v1769 = vsel %vm1768, 1, 0
    %v1770 = vcvt.s32.f32 %v1769
    %v1771 = vmul.f32 %v1134, %v1770
    %v1772 = vadd.f32 %v1767, %v1771
    %vm1773 = vcmp.eq.s32.totalorder %v55, 3
    %v1774 = vsel %vm1773, 1, 0
    %v1775 = vcvt.s32.f32 %v1774
    %v1776 = vstv %s1756
    %v1777 = vmul.f32 %v1776, %v1775
    %v1778 = vadd.f32 %v1772, %v1777
    %1779 = vst [vmem:[#allocation2] sm:$0x1] %v1778
    // Predicated region
    $region66: #{tpu_custom_call.1} parent=1 // pred_check
      _
    $region67: #{tpu_custom_call.1} parent=1 // pred_check_branch
      %1781 = sbr.rel (0) target = $region69
    $region68: #{tpu_custom_call.1} parent=1 // pred_region
      %s1783 = ssub.s32 16, 16
      %1784 = vsyncadd [#allocation3], %s1783
      %s1786 = sshll.u32 [#allocation2], 4
      %s1787 = int_to_ptr.vmem [resolvable:$true] %s1786
      %1789 = dma.vmem_to_hbm [thread:$0]  %s1787, 16, %s16, [#allocation3]
    $region69: #{tpu_custom_call.1} parent=1 // pred_fallthru
      _
    // Predicated region
    $region70: #{tpu_custom_call.1} parent=1 // pred_check
      _
    $region71: #{tpu_custom_call.1} parent=1 // pred_check_branch
      %1791 = sbr.rel (0) target = $region73
    $region72: #{tpu_custom_call.1} parent=1 // pred_region
      %1792 = dma.done [#allocation3], 16
    $region73: #{tpu_custom_call.1} parent=1 // pred_fallthru
      _
    %1793 = vsyncpa [#allocation3], 1

</llo_original>
